<compile_context>
chip_gen: v6e
topology: v6e:2x2x1
jax: 0.10.0
libtpu: 0.0.40
codegen_flags: <defaults>
</compile_context>

<pallas_src>
import functools

import jax
import jax.numpy as jnp
from jax.experimental import pallas as pl
from jax.experimental.pallas import tpu as pltpu


def _lstm_mean_kernel(x_ref, wih_ref, whh_ref, b_ref, out_ref):
    """Single invocation: whole sequence, recurrence fully unrolled in-kernel.

    x_ref:   (B, T, E)   f32
    wih_ref: (E, 4H)     f32  (W_ih^T)
    whh_ref: (H, 4H)     f32  (W_hh^T)
    b_ref:   (1, 4H)     f32  (b_ih + b_hh)
    out_ref: (B, H)      f32  (mean over time of h_t)
    """
    B, T, E = x_ref.shape
    H4 = whh_ref.shape[1]
    H = H4 // 4

    # Hoisted input projection for all T at once: one (B*T, E) @ (E, 4H)
    # matmul + a single bias add (instead of T tiny matmuls + T bias adds).
    x_all = x_ref[...]                                     # (B, T, E)
    xg = jnp.dot(x_all.reshape(B * T, E), wih_ref[...],
                 preferred_element_type=jnp.float32)       # (B*T, 4H)
    xg = (xg + b_ref[...]).reshape(B, T, H4)               # (B, T, 4H)

    whh = whh_ref[...]                                     # stays resident in VMEM

    h = jnp.zeros((B, H), jnp.float32)
    c = jnp.zeros((B, H), jnp.float32)
    acc = jnp.zeros((B, H), jnp.float32)

    # T is small and static: full unroll, h/c/acc live in vregs.
    for t in range(T):
        gates = xg[:, t, :] + jnp.dot(h, whh,
                                      preferred_element_type=jnp.float32)  # (B, 4H)
        # Two full-tile EUP ops instead of four quarter-tile ones.
        sig = jax.nn.sigmoid(gates)
        th = jnp.tanh(gates)
        i_g = sig[:, 0 * H:1 * H]
        f_g = sig[:, 1 * H:2 * H]
        g_g = th[:, 2 * H:3 * H]
        o_g = sig[:, 3 * H:4 * H]
        c = f_g * c + i_g * g_g
        h = o_g * jnp.tanh(c)
        acc = acc + h

    # Note: (B, H) = (8, 32) is lane-sparse (masked store) but written once.
    out_ref[...] = (acc * (1.0 / T)).astype(out_ref.dtype)


@functools.partial(jax.jit, static_argnames=())
def lstm_mean_pallas(x, w_ih, w_hh, b_ih, b_hh):
    """x: [..., T, E] float32. Returns [...(leading), H] float32."""
    lead_shape = x.shape[:-2]
    T, E = x.shape[-2], x.shape[-1]
    H4 = w_ih.shape[0]
    H = H4 // 4

    x_flat = x.reshape((-1, T, E)).astype(jnp.float32)   # (B, T, E), no transpose
    B = x_flat.shape[0]

    wih_t = jnp.transpose(w_ih)                          # (E, 4H)
    whh_t = jnp.transpose(w_hh)                          # (H, 4H)
    b = (b_ih + b_hh).reshape((1, H4)).astype(jnp.float32)

    out = pl.pallas_call(
        _lstm_mean_kernel,
        out_shape=jax.ShapeDtypeStruct((B, H), jnp.float32),
        grid=(1,),
        in_specs=[
            pl.BlockSpec((B, T, E), lambda i: (0, 0, 0)),   # full x slab
            pl.BlockSpec((E, H4), lambda i: (0, 0)),        # W_ih^T
            pl.BlockSpec((H, H4), lambda i: (0, 0)),        # W_hh^T
            pl.BlockSpec((1, H4), lambda i: (0, 0)),        # bias
        ],
        out_specs=pl.BlockSpec((B, H), lambda i: (0, 0)),
        compiler_params=pltpu.CompilerParams(
            dimension_semantics=("arbitrary",),
        ),
    )(x_flat, wih_t, whh_t, b)

    return out.reshape(lead_shape + (H,))


def lstm_mean_reference(x, w_ih, w_hh, b_ih, b_hh):
    """Pure-JAX reference (matches torch.nn.LSTM single layer, unidirectional)."""
    lead_shape = x.shape[:-2]
    T, E = x.shape[-2], x.shape[-1]
    H = w_hh.shape[1]
    xf = x.reshape((-1, T, E))
    B = xf.shape[0]

    def step(carry, x_t):
        h, c = carry
        gates = x_t @ w_ih.T + h @ w_hh.T + b_ih + b_hh
        i = jax.nn.sigmoid(gates[:, 0 * H:1 * H])
        f = jax.nn.sigmoid(gates[:, 1 * H:2 * H])
        g = jnp.tanh(gates[:, 2 * H:3 * H])
        o = jax.nn.sigmoid(gates[:, 3 * H:4 * H])
        c = f * c + i * g
        h = o * jnp.tanh(c)
        return (h, c), h

    h0 = jnp.zeros((B, H), jnp.float32)
    c0 = jnp.zeros((B, H), jnp.float32)
    _, hs = jax.lax.scan(step, (h0, c0), jnp.transpose(xf, (1, 0, 2)))
    out = jnp.mean(hs, axis=0)   # mean over time == torch.mean(output, dim=-2)
    return out.reshape(lead_shape + (H,))


if __name__ == "__main__":
    # args: embed_size=16, lstm_hidden_size=32, num_layers=1, bidirectional=False
    EMBED, HIDDEN, SEQ = 16, 32, 8
    LEAD = (2, 4)                      # arbitrary leading dims, flattened by forward()

    key = jax.random.PRNGKey(0)
    kx, k1, k2, k3, k4 = jax.random.split(key, 5)

    x = jax.random.normal(kx, LEAD + (SEQ, EMBED), dtype=jnp.float32)

    # Deterministic init mimicking PyTorch's uniform(-1/sqrt(H), 1/sqrt(H)).
    bound = 1.0 / jnp.sqrt(jnp.float32(HIDDEN))
    w_ih = jax.random.uniform(k1, (4 * HIDDEN, EMBED), jnp.float32, -bound, bound)
    w_hh = jax.random.uniform(k2, (4 * HIDDEN, HIDDEN), jnp.float32, -bound, bound)
    b_ih = jax.random.uniform(k3, (4 * HIDDEN,), jnp.float32, -bound, bound)
    b_hh = jax.random.uniform(k4, (4 * HIDDEN,), jnp.float32, -bound, bound)

    out = lstm_mean_pallas(x, w_ih, w_hh, b_ih, b_hh)
    out = jax.block_until_ready(out)

    ref = jax.block_until_ready(lstm_mean_reference(x, w_ih, w_hh, b_ih, b_hh))
    assert out.shape == LEAD + (HIDDEN,), out.shape
    assert jnp.allclose(out, ref, rtol=2e-3, atol=2e-3), float(jnp.max(jnp.abs(out - ref)))

    # TODO(synk): num_layers>1 / bidirectional / inter-layer dropout variants of
    # nn.LSTM are not implemented; config here is 1 layer, unidirectional, eval mode.
    print("KERNEL_OK")
</pallas_src>

<mosaic_0001>
module attributes {stable_mosaic.version = 11 : i64} {
  func.func @_lstm_mean_kernel(%arg0: i32, %arg1: memref<8x8x16xf32, #tpu.memory_space<vmem>>, %arg2: memref<16x128xf32, #tpu.memory_space<vmem>>, %arg3: memref<32x128xf32, #tpu.memory_space<vmem>>, %arg4: memref<1x128xf32, #tpu.memory_space<vmem>>, %arg5: memref<8x32xf32, #tpu.memory_space<vmem>>) attributes {dimension_semantics = [#tpu.dimension_semantics<arbitrary>], iteration_bounds = array<i64: 1>, scalar_prefetch = 0 : i64, scratch_operands = 0 : i64, tpu.core_type = #tpu.core_type<tc>, window_params = [{pipeline_mode = #tpu.pipeline_mode<synchronous>, transform_indices = @transform_0, window_bounds = array<i64: 8, 8, 16>}, {pipeline_mode = #tpu.pipeline_mode<synchronous>, transform_indices = @transform_1, window_bounds = array<i64: 16, 128>}, {pipeline_mode = #tpu.pipeline_mode<synchronous>, transform_indices = @transform_2, window_bounds = array<i64: 32, 128>}, {pipeline_mode = #tpu.pipeline_mode<synchronous>, transform_indices = @transform_3, window_bounds = array<i64: 1, 128>}, {pipeline_mode = #tpu.pipeline_mode<synchronous>, transform_indices = @transform_4, window_bounds = array<i64: 8, 32>}]} {
    %c0 = arith.constant 0 : index
    %c0_0 = arith.constant 0 : index
    %c0_1 = arith.constant 0 : index
    %0 = vector.load %arg1[%c0, %c0_0, %c0_1] : memref<8x8x16xf32, #tpu.memory_space<vmem>>, vector<8x8x16xf32>
    %1 = vector.shape_cast %0 : vector<8x8x16xf32> to vector<64x16xf32>
    %c0_2 = arith.constant 0 : index
    %c0_3 = arith.constant 0 : index
    %2 = vector.load %arg2[%c0_2, %c0_3] : memref<16x128xf32, #tpu.memory_space<vmem>>, vector<16x128xf32>
    %cst = arith.constant dense<0.000000e+00> : vector<64x128xf32>
    %3 = tpu.matmul %1, %2, %cst {dimension_numbers = #tpu.dot_dimension_numbers<[1], [0], [0], [1], [0, 0, 1, 1], [], []>} : vector<64x16xf32>, vector<16x128xf32>, vector<64x128xf32> -> vector<64x128xf32>
    %c0_4 = arith.constant 0 : index
    %c0_5 = arith.constant 0 : index
    %4 = vector.load %arg4[%c0_4, %c0_5] : memref<1x128xf32, #tpu.memory_space<vmem>>, vector<1x128xf32>
    %5 = vector.broadcast %4 : vector<1x128xf32> to vector<64x128xf32>
    %6 = arith.addf %3, %5 : vector<64x128xf32>
    %7 = vector.shape_cast %6 : vector<64x128xf32> to vector<8x8x128xf32>
    %c0_6 = arith.constant 0 : index
    %c0_7 = arith.constant 0 : index
    %8 = vector.load %arg3[%c0_6, %c0_7] : memref<32x128xf32, #tpu.memory_space<vmem>>, vector<32x128xf32>
    %cst_8 = arith.constant 0.000000e+00 : f32
    %9 = vector.broadcast %cst_8 : f32 to vector<8x32xf32>
    %cst_9 = arith.constant 0.000000e+00 : f32
    %10 = vector.broadcast %cst_9 : f32 to vector<8x32xf32>
    %cst_10 = arith.constant 0.000000e+00 : f32
    %11 = vector.broadcast %cst_10 : f32 to vector<8x32xf32>
    %12 = vector.extract_strided_slice %7 {offsets = [0, 0, 0], sizes = [8, 1, 128], strides = [1, 1, 1]} : vector<8x8x128xf32> to vector<8x1x128xf32>
    %13 = vector.shape_cast %12 : vector<8x1x128xf32> to vector<8x128xf32>
    %cst_11 = arith.constant dense<0.000000e+00> : vector<8x128xf32>
    %14 = tpu.matmul %9, %8, %cst_11 {dimension_numbers = #tpu.dot_dimension_numbers<[1], [0], [0], [1], [0, 0, 1, 1], [], []>} : vector<8x32xf32>, vector<32x128xf32>, vector<8x128xf32> -> vector<8x128xf32>
    %15 = arith.addf %13, %14 : vector<8x128xf32>
    %16 = arith.negf %15 : vector<8x128xf32>
    %17 = math.exp %16 : vector<8x128xf32>
    %cst_12 = arith.constant 1.000000e+00 : f32
    %18 = vector.broadcast %cst_12 : f32 to vector<8x128xf32>
    %19 = arith.addf %18, %17 : vector<8x128xf32>
    %20 = arith.divf %18, %19 : vector<8x128xf32>
    %21 = math.tanh %15 : vector<8x128xf32>
    %22 = vector.extract_strided_slice %20 {offsets = [0, 0], sizes = [8, 32], strides = [1, 1]} : vector<8x128xf32> to vector<8x32xf32>
    %23 = vector.extract_strided_slice %20 {offsets = [0, 32], sizes = [8, 32], strides = [1, 1]} : vector<8x128xf32> to vector<8x32xf32>
    %24 = vector.extract_strided_slice %21 {offsets = [0, 64], sizes = [8, 32], strides = [1, 1]} : vector<8x128xf32> to vector<8x32xf32>
    %25 = vector.extract_strided_slice %20 {offsets = [0, 96], sizes = [8, 32], strides = [1, 1]} : vector<8x128xf32> to vector<8x32xf32>
    %26 = arith.mulf %23, %10 : vector<8x32xf32>
    %27 = arith.mulf %22, %24 : vector<8x32xf32>
    %28 = arith.addf %26, %27 : vector<8x32xf32>
    %29 = math.tanh %28 : vector<8x32xf32>
    %30 = arith.mulf %25, %29 : vector<8x32xf32>
    %31 = arith.addf %11, %30 : vector<8x32xf32>
    %32 = vector.extract_strided_slice %7 {offsets = [0, 1, 0], sizes = [8, 1, 128], strides = [1, 1, 1]} : vector<8x8x128xf32> to vector<8x1x128xf32>
    %33 = vector.shape_cast %32 : vector<8x1x128xf32> to vector<8x128xf32>
    %cst_13 = arith.constant dense<0.000000e+00> : vector<8x128xf32>
    %34 = tpu.matmul %30, %8, %cst_13 {dimension_numbers = #tpu.dot_dimension_numbers<[1], [0], [0], [1], [0, 0, 1, 1], [], []>} : vector<8x32xf32>, vector<32x128xf32>, vector<8x128xf32> -> vector<8x128xf32>
    %35 = arith.addf %33, %34 : vector<8x128xf32>
    %36 = arith.negf %35 : vector<8x128xf32>
    %37 = math.exp %36 : vector<8x128xf32>
    %cst_14 = arith.constant 1.000000e+00 : f32
    %38 = vector.broadcast %cst_14 : f32 to vector<8x128xf32>
    %39 = arith.addf %38, %37 : vector<8x128xf32>
    %40 = arith.divf %38, %39 : vector<8x128xf32>
    %41 = math.tanh %35 : vector<8x128xf32>
    %42 = vector.extract_strided_slice %40 {offsets = [0, 0], sizes = [8, 32], strides = [1, 1]} : vector<8x128xf32> to vector<8x32xf32>
    %43 = vector.extract_strided_slice %40 {offsets = [0, 32], sizes = [8, 32], strides = [1, 1]} : vector<8x128xf32> to vector<8x32xf32>
    %44 = vector.extract_strided_slice %41 {offsets = [0, 64], sizes = [8, 32], strides = [1, 1]} : vector<8x128xf32> to vector<8x32xf32>
    %45 = vector.extract_strided_slice %40 {offsets = [0, 96], sizes = [8, 32], strides = [1, 1]} : vector<8x128xf32> to vector<8x32xf32>
    %46 = arith.mulf %43, %28 : vector<8x32xf32>
    %47 = arith.mulf %42, %44 : vector<8x32xf32>
    %48 = arith.addf %46, %47 : vector<8x32xf32>
    %49 = math.tanh %48 : vector<8x32xf32>
    %50 = arith.mulf %45, %49 : vector<8x32xf32>
    %51 = arith.addf %31, %50 : vector<8x32xf32>
    %52 = vector.extract_strided_slice %7 {offsets = [0, 2, 0], sizes = [8, 1, 128], strides = [1, 1, 1]} : vector<8x8x128xf32> to vector<8x1x128xf32>
    %53 = vector.shape_cast %52 : vector<8x1x128xf32> to vector<8x128xf32>
    %cst_15 = arith.constant dense<0.000000e+00> : vector<8x128xf32>
    %54 = tpu.matmul %50, %8, %cst_15 {dimension_numbers = #tpu.dot_dimension_numbers<[1], [0], [0], [1], [0, 0, 1, 1], [], []>} : vector<8x32xf32>, vector<32x128xf32>, vector<8x128xf32> -> vector<8x128xf32>
    %55 = arith.addf %53, %54 : vector<8x128xf32>
    %56 = arith.negf %55 : vector<8x128xf32>
    %57 = math.exp %56 : vector<8x128xf32>
    %cst_16 = arith.constant 1.000000e+00 : f32
    %58 = vector.broadcast %cst_16 : f32 to vector<8x128xf32>
    %59 = arith.addf %58, %57 : vector<8x128xf32>
    %60 = arith.divf %58, %59 : vector<8x128xf32>
    %61 = math.tanh %55 : vector<8x128xf32>
    %62 = vector.extract_strided_slice %60 {offsets = [0, 0], sizes = [8, 32], strides = [1, 1]} : vector<8x128xf32> to vector<8x32xf32>
    %63 = vector.extract_strided_slice %60 {offsets = [0, 32], sizes = [8, 32], strides = [1, 1]} : vector<8x128xf32> to vector<8x32xf32>
    %64 = vector.extract_strided_slice %61 {offsets = [0, 64], sizes = [8, 32], strides = [1, 1]} : vector<8x128xf32> to vector<8x32xf32>
    %65 = vector.extract_strided_slice %60 {offsets = [0, 96], sizes = [8, 32], strides = [1, 1]} : vector<8x128xf32> to vector<8x32xf32>
    %66 = arith.mulf %63, %48 : vector<8x32xf32>
    %67 = arith.mulf %62, %64 : vector<8x32xf32>
    %68 = arith.addf %66, %67 : vector<8x32xf32>
    %69 = math.tanh %68 : vector<8x32xf32>
    %70 = arith.mulf %65, %69 : vector<8x32xf32>
    %71 = arith.addf %51, %70 : vector<8x32xf32>
    %72 = vector.extract_strided_slice %7 {offsets = [0, 3, 0], sizes = [8, 1, 128], strides = [1, 1, 1]} : vector<8x8x128xf32> to vector<8x1x128xf32>
    %73 = vector.shape_cast %72 : vector<8x1x128xf32> to vector<8x128xf32>
    %cst_17 = arith.constant dense<0.000000e+00> : vector<8x128xf32>
    %74 = tpu.matmul %70, %8, %cst_17 {dimension_numbers = #tpu.dot_dimension_numbers<[1], [0], [0], [1], [0, 0, 1, 1], [], []>} : vector<8x32xf32>, vector<32x128xf32>, vector<8x128xf32> -> vector<8x128xf32>
    %75 = arith.addf %73, %74 : vector<8x128xf32>
    %76 = arith.negf %75 : vector<8x128xf32>
    %77 = math.exp %76 : vector<8x128xf32>
    %cst_18 = arith.constant 1.000000e+00 : f32
    %78 = vector.broadcast %cst_18 : f32 to vector<8x128xf32>
    %79 = arith.addf %78, %77 : vector<8x128xf32>
    %80 = arith.divf %78, %79 : vector<8x128xf32>
    %81 = math.tanh %75 : vector<8x128xf32>
    %82 = vector.extract_strided_slice %80 {offsets = [0, 0], sizes = [8, 32], strides = [1, 1]} : vector<8x128xf32> to vector<8x32xf32>
    %83 = vector.extract_strided_slice %80 {offsets = [0, 32], sizes = [8, 32], strides = [1, 1]} : vector<8x128xf32> to vector<8x32xf32>
    %84 = vector.extract_strided_slice %81 {offsets = [0, 64], sizes = [8, 32], strides = [1, 1]} : vector<8x128xf32> to vector<8x32xf32>
    %85 = vector.extract_strided_slice %80 {offsets = [0, 96], sizes = [8, 32], strides = [1, 1]} : vector<8x128xf32> to vector<8x32xf32>
    %86 = arith.mulf %83, %68 : vector<8x32xf32>
    %87 = arith.mulf %82, %84 : vector<8x32xf32>
    %88 = arith.addf %86, %87 : vector<8x32xf32>
    %89 = math.tanh %88 : vector<8x32xf32>
    %90 = arith.mulf %85, %89 : vector<8x32xf32>
    %91 = arith.addf %71, %90 : vector<8x32xf32>
    %92 = vector.extract_strided_slice %7 {offsets = [0, 4, 0], sizes = [8, 1, 128], strides = [1, 1, 1]} : vector<8x8x128xf32> to vector<8x1x128xf32>
    %93 = vector.shape_cast %92 : vector<8x1x128xf32> to vector<8x128xf32>
    %cst_19 = arith.constant dense<0.000000e+00> : vector<8x128xf32>
    %94 = tpu.matmul %90, %8, %cst_19 {dimension_numbers = #tpu.dot_dimension_numbers<[1], [0], [0], [1], [0, 0, 1, 1], [], []>} : vector<8x32xf32>, vector<32x128xf32>, vector<8x128xf32> -> vector<8x128xf32>
    %95 = arith.addf %93, %94 : vector<8x128xf32>
    %96 = arith.negf %95 : vector<8x128xf32>
    %97 = math.exp %96 : vector<8x128xf32>
    %cst_20 = arith.constant 1.000000e+00 : f32
    %98 = vector.broadcast %cst_20 : f32 to vector<8x128xf32>
    %99 = arith.addf %98, %97 : vector<8x128xf32>
    %100 = arith.divf %98, %99 : vector<8x128xf32>
    %101 = math.tanh %95 : vector<8x128xf32>
    %102 = vector.extract_strided_slice %100 {offsets = [0, 0], sizes = [8, 32], strides = [1, 1]} : vector<8x128xf32> to vector<8x32xf32>
    %103 = vector.extract_strided_slice %100 {offsets = [0, 32], sizes = [8, 32], strides = [1, 1]} : vector<8x128xf32> to vector<8x32xf32>
    %104 = vector.extract_strided_slice %101 {offsets = [0, 64], sizes = [8, 32], strides = [1, 1]} : vector<8x128xf32> to vector<8x32xf32>
    %105 = vector.extract_strided_slice %100 {offsets = [0, 96], sizes = [8, 32], strides = [1, 1]} : vector<8x128xf32> to vector<8x32xf32>
    %106 = arith.mulf %103, %88 : vector<8x32xf32>
    %107 = arith.mulf %102, %104 : vector<8x32xf32>
    %108 = arith.addf %106, %107 : vector<8x32xf32>
    %109 = math.tanh %108 : vector<8x32xf32>
    %110 = arith.mulf %105, %109 : vector<8x32xf32>
    %111 = arith.addf %91, %110 : vector<8x32xf32>
    %112 = vector.extract_strided_slice %7 {offsets = [0, 5, 0], sizes = [8, 1, 128], strides = [1, 1, 1]} : vector<8x8x128xf32> to vector<8x1x128xf32>
    %113 = vector.shape_cast %112 : vector<8x1x128xf32> to vector<8x128xf32>
    %cst_21 = arith.constant dense<0.000000e+00> : vector<8x128xf32>
    %114 = tpu.matmul %110, %8, %cst_21 {dimension_numbers = #tpu.dot_dimension_numbers<[1], [0], [0], [1], [0, 0, 1, 1], [], []>} : vector<8x32xf32>, vector<32x128xf32>, vector<8x128xf32> -> vector<8x128xf32>
    %115 = arith.addf %113, %114 : vector<8x128xf32>
    %116 = arith.negf %115 : vector<8x128xf32>
    %117 = math.exp %116 : vector<8x128xf32>
    %cst_22 = arith.constant 1.000000e+00 : f32
    %118 = vector.broadcast %cst_22 : f32 to vector<8x128xf32>
    %119 = arith.addf %118, %117 : vector<8x128xf32>
    %120 = arith.divf %118, %119 : vector<8x128xf32>
    %121 = math.tanh %115 : vector<8x128xf32>
    %122 = vector.extract_strided_slice %120 {offsets = [0, 0], sizes = [8, 32], strides = [1, 1]} : vector<8x128xf32> to vector<8x32xf32>
    %123 = vector.extract_strided_slice %120 {offsets = [0, 32], sizes = [8, 32], strides = [1, 1]} : vector<8x128xf32> to vector<8x32xf32>
    %124 = vector.extract_strided_slice %121 {offsets = [0, 64], sizes = [8, 32], strides = [1, 1]} : vector<8x128xf32> to vector<8x32xf32>
    %125 = vector.extract_strided_slice %120 {offsets = [0, 96], sizes = [8, 32], strides = [1, 1]} : vector<8x128xf32> to vector<8x32xf32>
    %126 = arith.mulf %123, %108 : vector<8x32xf32>
    %127 = arith.mulf %122, %124 : vector<8x32xf32>
    %128 = arith.addf %126, %127 : vector<8x32xf32>
    %129 = math.tanh %128 : vector<8x32xf32>
    %130 = arith.mulf %125, %129 : vector<8x32xf32>
    %131 = arith.addf %111, %130 : vector<8x32xf32>
    %132 = vector.extract_strided_slice %7 {offsets = [0, 6, 0], sizes = [8, 1, 128], strides = [1, 1, 1]} : vector<8x8x128xf32> to vector<8x1x128xf32>
    %133 = vector.shape_cast %132 : vector<8x1x128xf32> to vector<8x128xf32>
    %cst_23 = arith.constant dense<0.000000e+00> : vector<8x128xf32>
    %134 = tpu.matmul %130, %8, %cst_23 {dimension_numbers = #tpu.dot_dimension_numbers<[1], [0], [0], [1], [0, 0, 1, 1], [], []>} : vector<8x32xf32>, vector<32x128xf32>, vector<8x128xf32> -> vector<8x128xf32>
    %135 = arith.addf %133, %134 : vector<8x128xf32>
    %136 = arith.negf %135 : vector<8x128xf32>
    %137 = math.exp %136 : vector<8x128xf32>
    %cst_24 = arith.constant 1.000000e+00 : f32
    %138 = vector.broadcast %cst_24 : f32 to vector<8x128xf32>
    %139 = arith.addf %138, %137 : vector<8x128xf32>
    %140 = arith.divf %138, %139 : vector<8x128xf32>
    %141 = math.tanh %135 : vector<8x128xf32>
    %142 = vector.extract_strided_slice %140 {offsets = [0, 0], sizes = [8, 32], strides = [1, 1]} : vector<8x128xf32> to vector<8x32xf32>
    %143 = vector.extract_strided_slice %140 {offsets = [0, 32], sizes = [8, 32], strides = [1, 1]} : vector<8x128xf32> to vector<8x32xf32>
    %144 = vector.extract_strided_slice %141 {offsets = [0, 64], sizes = [8, 32], strides = [1, 1]} : vector<8x128xf32> to vector<8x32xf32>
    %145 = vector.extract_strided_slice %140 {offsets = [0, 96], sizes = [8, 32], strides = [1, 1]} : vector<8x128xf32> to vector<8x32xf32>
    %146 = arith.mulf %143, %128 : vector<8x32xf32>
    %147 = arith.mulf %142, %144 : vector<8x32xf32>
    %148 = arith.addf %146, %147 : vector<8x32xf32>
    %149 = math.tanh %148 : vector<8x32xf32>
    %150 = arith.mulf %145, %149 : vector<8x32xf32>
    %151 = arith.addf %131, %150 : vector<8x32xf32>
    %152 = vector.extract_strided_slice %7 {offsets = [0, 7, 0], sizes = [8, 1, 128], strides = [1, 1, 1]} : vector<8x8x128xf32> to vector<8x1x128xf32>
    %153 = vector.shape_cast %152 : vector<8x1x128xf32> to vector<8x128xf32>
    %cst_25 = arith.constant dense<0.000000e+00> : vector<8x128xf32>
    %154 = tpu.matmul %150, %8, %cst_25 {dimension_numbers = #tpu.dot_dimension_numbers<[1], [0], [0], [1], [0, 0, 1, 1], [], []>} : vector<8x32xf32>, vector<32x128xf32>, vector<8x128xf32> -> vector<8x128xf32>
    %155 = arith.addf %153, %154 : vector<8x128xf32>
    %156 = arith.negf %155 : vector<8x128xf32>
    %157 = math.exp %156 : vector<8x128xf32>
    %cst_26 = arith.constant 1.000000e+00 : f32
    %158 = vector.broadcast %cst_26 : f32 to vector<8x128xf32>
    %159 = arith.addf %158, %157 : vector<8x128xf32>
    %160 = arith.divf %158, %159 : vector<8x128xf32>
    %161 = math.tanh %155 : vector<8x128xf32>
    %162 = vector.extract_strided_slice %160 {offsets = [0, 0], sizes = [8, 32], strides = [1, 1]} : vector<8x128xf32> to vector<8x32xf32>
    %163 = vector.extract_strided_slice %160 {offsets = [0, 32], sizes = [8, 32], strides = [1, 1]} : vector<8x128xf32> to vector<8x32xf32>
    %164 = vector.extract_strided_slice %161 {offsets = [0, 64], sizes = [8, 32], strides = [1, 1]} : vector<8x128xf32> to vector<8x32xf32>
    %165 = vector.extract_strided_slice %160 {offsets = [0, 96], sizes = [8, 32], strides = [1, 1]} : vector<8x128xf32> to vector<8x32xf32>
    %166 = arith.mulf %163, %148 : vector<8x32xf32>
    %167 = arith.mulf %162, %164 : vector<8x32xf32>
    %168 = arith.addf %166, %167 : vector<8x32xf32>
    %169 = math.tanh %168 : vector<8x32xf32>
    %170 = arith.mulf %165, %169 : vector<8x32xf32>
    %171 = arith.addf %151, %170 : vector<8x32xf32>
    %cst_27 = arith.constant 1.250000e-01 : f32
    %172 = vector.broadcast %cst_27 : f32 to vector<8x32xf32>
    %173 = arith.mulf %171, %172 : vector<8x32xf32>
    %c0_28 = arith.constant 0 : index
    %c0_29 = arith.constant 0 : index
    %174 = vector.load %arg5[%c0_28, %c0_29] : memref<8x32xf32, #tpu.memory_space<vmem>>, vector<8x32xf32>
    tpu.vector_store %arg5[%c0_28, %c0_29], %173 {strides = array<i32>} : memref<8x32xf32, #tpu.memory_space<vmem>>, vector<8x32xf32>,
    return
  }
  func.func @transform_0(%arg0: i32) -> (i32, i32, i32) {
    %c0_i32 = arith.constant 0 : i32
    %c0_i32_0 = arith.constant 0 : i32
    %c0_i32_1 = arith.constant 0 : i32
    %c0_i32_2 = arith.constant 0 : i32
    return %c0_i32, %c0_i32_0, %c0_i32_1 : i32, i32, i32
  }
  func.func @transform_1(%arg0: i32) -> (i32, i32) {
    %c0_i32 = arith.constant 0 : i32
    %c0_i32_0 = arith.constant 0 : i32
    %c0_i32_1 = arith.constant 0 : i32
    return %c0_i32, %c0_i32_0 : i32, i32
  }
  func.func @transform_2(%arg0: i32) -> (i32, i32) {
    %c0_i32 = arith.constant 0 : i32
    %c0_i32_0 = arith.constant 0 : i32
    %c0_i32_1 = arith.constant 0 : i32
    return %c0_i32, %c0_i32_0 : i32, i32
  }
  func.func @transform_3(%arg0: i32) -> (i32, i32) {
    %c0_i32 = arith.constant 0 : i32
    %c0_i32_0 = arith.constant 0 : i32
    %c0_i32_1 = arith.constant 0 : i32
    return %c0_i32, %c0_i32_0 : i32, i32
  }
  func.func @transform_4(%arg0: i32) -> (i32, i32) {
    %c0_i32 = arith.constant 0 : i32
    %c0_i32_0 = arith.constant 0 : i32
    %c0_i32_1 = arith.constant 0 : i32
    return %c0_i32, %c0_i32_0 : i32, i32
  }
}

</mosaic_0001>

<llo_original>
// kernel: lstm_mean_pallas.1
$region0: #{lstm_mean_pallas.1}
  #allocation0 [shape = 'u32[]', space=smem, size = 0x4, offset = 0x4, fixed_abs, tag = 'smem constant byte address 0x4 - core index']
  #allocation1 [shape = 'u32[144,128]{1,0:T(1,128)}', space=vmem, size = 0x12000, scoped, tag = 'internal scratch']
  %s0 = inlined_call_operand.hbm [shape: f32[8,8,16], index: 0, kind: input, shape index: {}]
  %s1 = inlined_call_operand.hbm [shape: f32[16,128], index: 1, kind: input, shape index: {}]
  %s2 = inlined_call_operand.hbm [shape: f32[32,128], index: 2, kind: input, shape index: {}]
  %s3 = inlined_call_operand.vmem [shape: f32[1,128], index: 3, kind: input, shape index: {}]
  %s4 = inlined_call_operand.hbm [shape: f32[8,32], index: 4, kind: output, shape index: {}]
  %s5 = sld [smem:[#allocation0]]
  $region38: #{lstm_mean_pallas.1} parent=0
    _
  %s7 = ssub.s32 1, %s5
  %s8 = scalar_select 0, %s7, %s5
  $region1: #{lstm_mean_pallas.1} parent=0
    #allocation2 [shape = 'u8[32768]{0}', space=vmem, size = 0x8000, scoped, tag = 'input window, operand 0, single buffered']
    #allocation3 [shape = 's32[1]{0}', space=sflag, size = 0x4, scoped, tag = 'scoped memory for lstm_mean_pallas.1']
    #allocation4 [shape = 's32[1]{0}', space=sflag, size = 0x4, scoped, tag = 'scoped memory for lstm_mean_pallas.1']
    #allocation5 [shape = 'u8[8192]{0}', space=vmem, size = 0x2000, scoped, tag = 'input window, operand 1, single buffered']
    #allocation6 [shape = 's32[1]{0}', space=sflag, size = 0x4, scoped, tag = 'scoped memory for lstm_mean_pallas.1']
    #allocation7 [shape = 'u8[16384]{0}', space=vmem, size = 0x4000, scoped, tag = 'input window, operand 2, single buffered']
    #allocation8 [shape = 'u8[4096]{0}', space=vmem, size = 0x1000, scoped, tag = 'output window, operand 0, single buffered']
    %9 = vsyncpa [#allocation3], 0
    %10 = vsyncpa [#allocation6], 0
    %11 = vsyncpa [#allocation4], 0
    // Predicated region
    $region2: #{lstm_mean_pallas.1} parent=1 // pred_check
      _
    $region3: #{lstm_mean_pallas.1} parent=1 // pred_check_branch
      %13 = sbr.rel (0) target = $region5
    $region4: #{lstm_mean_pallas.1} parent=1 // pred_region
      %s15 = ssub.s32 1024, 1024
      %16 = vsyncadd [#allocation3], %s15
      %s17 = sshll.u32 [#allocation2], 4
      %s18 = int_to_ptr.vmem [resolvable:$true] %s17
      %23 = dma.hbm_to_vmem [thread:$0]  %s0, 1024, %s18, [#allocation3], 128, 128, 8
    $region5: #{lstm_mean_pallas.1} parent=1 // pred_fallthru
      _
    // Predicated region
    $region6: #{lstm_mean_pallas.1} parent=1 // pred_check
      _
    $region7: #{lstm_mean_pallas.1} parent=1 // pred_check_branch
      %25 = sbr.rel (0) target = $region9
    $region8: #{lstm_mean_pallas.1} parent=1 // pred_region
      %s27 = ssub.s32 256, 256
      %28 = vsyncadd [#allocation6], %s27
      %s29 = sshll.u32 [#allocation5], 4
      %s30 = int_to_ptr.vmem [resolvable:$true] %s29
      %35 = dma.hbm_to_vmem [thread:$0]  %s1, 256, %s30, [#allocation6], 128, 128, 8
    $region9: #{lstm_mean_pallas.1} parent=1 // pred_fallthru
      _
    // Predicated region
    $region10: #{lstm_mean_pallas.1} parent=1 // pred_check
      _
    $region11: #{lstm_mean_pallas.1} parent=1 // pred_check_branch
      %37 = sbr.rel (0) target = $region13
    $region12: #{lstm_mean_pallas.1} parent=1 // pred_region
      %s39 = ssub.s32 512, 512
      %40 = vsyncadd [#allocation6], %s39
      %s41 = sshll.u32 [#allocation7], 4
      %s42 = int_to_ptr.vmem [resolvable:$true] %s41
      %47 = dma.hbm_to_vmem [thread:$0]  %s2, 512, %s42, [#allocation6], 128, 128, 8
    $region13: #{lstm_mean_pallas.1} parent=1 // pred_fallthru
      _
    // Predicated region
    $region14: #{lstm_mean_pallas.1} parent=1 // pred_check
      _
    $region15: #{lstm_mean_pallas.1} parent=1 // pred_check_branch
      %49 = sbr.rel (0) target = $region17
    $region16: #{lstm_mean_pallas.1} parent=1 // pred_region
      _
    $region17: #{lstm_mean_pallas.1} parent=1 // pred_fallthru
      _
    // Predicated region
    $region18: #{lstm_mean_pallas.1} parent=1 // pred_check
      _
    $region19: #{lstm_mean_pallas.1} parent=1 // pred_check_branch
      %51 = sbr.rel (0) target = $region21
    $region20: #{lstm_mean_pallas.1} parent=1 // pred_region
      %52 = dma.done [#allocation3], 1024
    $region21: #{lstm_mean_pallas.1} parent=1 // pred_fallthru
      _
    // Predicated region
    $region22: #{lstm_mean_pallas.1} parent=1 // pred_check
      _
    $region23: #{lstm_mean_pallas.1} parent=1 // pred_check_branch
      %54 = sbr.rel (0) target = $region25
    $region24: #{lstm_mean_pallas.1} parent=1 // pred_region
      %55 = dma.done [#allocation6], 256
    $region25: #{lstm_mean_pallas.1} parent=1 // pred_fallthru
      _
    // Predicated region
    $region26: #{lstm_mean_pallas.1} parent=1 // pred_check
      _
    $region27: #{lstm_mean_pallas.1} parent=1 // pred_check_branch
      %57 = sbr.rel (0) target = $region29
    $region28: #{lstm_mean_pallas.1} parent=1 // pred_region
      %58 = dma.done [#allocation6], 512
    $region29: #{lstm_mean_pallas.1} parent=1 // pred_fallthru
      _
    %v59 = vld [vmem:[#allocation2] sm:$0xff]
    %v60 = vld [vmem:[#allocation2 + $0x8] sm:$0xff]
    %v61 = vld [vmem:[#allocation2 + $0x10] sm:$0xff]
    %v62 = vld [vmem:[#allocation2 + $0x18] sm:$0xff]
    %v63 = vld [vmem:[#allocation2 + $0x20] sm:$0xff]
    %v64 = vld [vmem:[#allocation2 + $0x28] sm:$0xff]
    %v65 = vld [vmem:[#allocation2 + $0x30] sm:$0xff]
    %v66 = vld [vmem:[#allocation2 + $0x38] sm:$0xff]
    %v67 = vld [vmem:[#allocation5] sm:$0xff]
    %v68 = vld [vmem:[#allocation5 + $0x8] sm:$0xff]
    %v69 = vld [vmem:[%s3] sm:$0x1]
    %v71 = vlaneseq
    %v72 = vshrl.u32 %v71, 7
    %v73 = vsub.s32 0, %v72
    %v74 = vrot.slane %v69, %v73
    %vm76 = vcmask 130048
    %v78 = vsel %vm76, %v59, 0
    %v81 = vsel %vm76, %v60, 0
    %v84 = vsel %vm76, %v61, 0
    %v87 = vsel %vm76, %v62, 0
    %v90 = vsel %vm76, %v63, 0
    %v93 = vsel %vm76, %v64, 0
    %v96 = vsel %vm76, %v65, 0
    %v99 = vsel %vm76, %v66, 0
    %101 = vmatprep.subr.mxu0 0.0
    %102 = vmatpush1.msra.mxu0 0.0
    %103 = vmatprep.subr.mxu0 0.0
    %104 = vmatpush1.msra.mxu0 0.0
    %105 = vmatprep.subr.mxu0 0.0
    %106 = vmatpush1.msra.mxu0 0.0
    %107 = vmatprep.subr.mxu0 0.0
    %108 = vmatpush1.msra.mxu0 0.0
    %109 = vmatprep.subr.mxu0 0.0
    %110 = vmatpush1.msra.mxu0 0.0
    %111 = vmatprep.subr.mxu0 0.0
    %112 = vmatpush1.msra.mxu0 0.0
    %113 = vmatprep.subr.mxu0 0.0
    %114 = vmatpush1.msra.mxu0 0.0
    %115 = vmatprep.subr.mxu0 0.0
    %116 = vmatpush1.msra.mxu0 0.0
    %117 = vmatprep.subr.mxu0 0.0
    %118 = vmatpush1.msra.mxu0 0.0
    %119 = vmatprep.subr.mxu0 0.0
    %120 = vmatpush1.msra.mxu0 0.0
    %121 = vmatprep.subr.mxu0 0.0
    %122 = vmatpush1.msra.mxu0 0.0
    %123 = vmatprep.subr.mxu0 0.0
    %124 = vmatpush1.msra.mxu0 0.0
    %125 = vmatprep.subr.mxu0 0.0
    %126 = vmatpush1.msra.mxu0 0.0
    %127 = vmatprep.subr.mxu0 0.0
    %128 = vmatpush1.msra.mxu0 0.0
    %129 = vmatprep.subr.mxu0 0.0
    %130 = vmatpush1.msra.mxu0 %v68
    %131 = vmatprep.subr.mxu0 0.0
    %132 = vmatpush1.msra.mxu0 %v67
    %133 = vmatprep.subr.mxu0 0.0
    %134 = vmatpush2.msra.mxu0 0.0
    %135 = vmatprep.subr.mxu0 0.0
    %136 = vmatpush2.msra.mxu0 0.0
    %137 = vmatprep.subr.mxu0 0.0
    %138 = vmatpush2.msra.mxu0 0.0
    %139 = vmatprep.subr.mxu0 0.0
    %140 = vmatpush2.msra.mxu0 0.0
    %141 = vmatprep.subr.mxu0 0.0
    %142 = vmatpush2.msra.mxu0 0.0
    %143 = vmatprep.subr.mxu0 0.0
    %144 = vmatpush2.msra.mxu0 0.0
    %145 = vmatprep.subr.mxu0 0.0
    %146 = vmatpush2.msra.mxu0 0.0
    %147 = vmatprep.subr.mxu0 0.0
    %148 = vmatpush2.msra.mxu0 0.0
    %149 = vmatprep.subr.mxu0 0.0
    %150 = vmatpush2.msra.mxu0 0.0
    %151 = vmatprep.subr.mxu0 0.0
    %152 = vmatpush2.msra.mxu0 0.0
    %153 = vmatprep.subr.mxu0 0.0
    %154 = vmatpush2.msra.mxu0 0.0
    %155 = vmatprep.subr.mxu0 0.0
    %156 = vmatpush2.msra.mxu0 0.0
    %157 = vmatprep.subr.mxu0 0.0
    %158 = vmatpush2.msra.mxu0 0.0
    %159 = vmatprep.subr.mxu0 0.0
    %160 = vmatpush2.msra.mxu0 0.0
    %161 = vmatprep.subr.mxu0 0.0
    %162 = vmatpush2.msra.mxu0 0.0
    %163 = vmatprep.subr.mxu0 0.0
    %164 = vmatpush2.msra.mxu0 0.0
    %165 = vmatprep.mubr.f32.mxu0 0.0
    %166 = vmatmul.mubr.f32.gmra.mxu0 %v78
    %v167 = vpop.f32.mrf.mxu0
    %v168 = vadd.f32 %v74, %v167
    %v169 = vpop.f32.mrf.mxu0
    %170 = vmatprep.mubr.f32.mxu0 0.0
    %171 = vmatmul.mubr.f32.gmra.mxu0 %v81
    %v172 = vpop.f32.mrf.mxu0
    %v173 = vadd.f32 %v74, %v172
    %v174 = vpop.f32.mrf.mxu0
    %175 = vmatprep.mubr.f32.mxu0 0.0
    %176 = vmatmul.mubr.f32.gmra.mxu0 %v84
    %v177 = vpop.f32.mrf.mxu0
    %v178 = vadd.f32 %v74, %v177
    %v179 = vpop.f32.mrf.mxu0
    %180 = vmatprep.mubr.f32.mxu0 0.0
    %181 = vmatmul.mubr.f32.gmra.mxu0 %v87
    %v182 = vpop.f32.mrf.mxu0
    %v183 = vadd.f32 %v74, %v182
    %v184 = vpop.f32.mrf.mxu0
    %185 = vmatprep.mubr.f32.mxu0 0.0
    %186 = vmatmul.mubr.f32.gmra.mxu0 %v90
    %v187 = vpop.f32.mrf.mxu0
    %v188 = vadd.f32 %v74, %v187
    %v189 = vpop.f32.mrf.mxu0
    %190 = vmatprep.mubr.f32.mxu0 0.0
    %191 = vmatmul.mubr.f32.gmra.mxu0 %v93
    %v192 = vpop.f32.mrf.mxu0
    %v193 = vadd.f32 %v74, %v192
    %v194 = vpop.f32.mrf.mxu0
    %195 = vmatprep.mubr.f32.mxu0 0.0
    %196 = vmatmul.mubr.f32.gmra.mxu0 %v96
    %v197 = vpop.f32.mrf.mxu0
    %v198 = vadd.f32 %v74, %v197
    %v199 = vpop.f32.mrf.mxu0
    %200 = vmatprep.mubr.f32.mxu0 0.0
    %201 = vmatmul.mubr.f32.gmra.mxu0 %v99
    %v202 = vpop.f32.mrf.mxu0
    %v203 = vadd.f32 %v74, %v202
    %v204 = vpop.f32.mrf.mxu0
    %205 = vdwg.mxu0
    %v206 = vld [vmem:[#allocation7] sm:$0xff]
    %v207 = vld [vmem:[#allocation7 + $0x8] sm:$0xff]
    %v208 = vld [vmem:[#allocation7 + $0x10] sm:$0xff]
    %v209 = vld [vmem:[#allocation7 + $0x18] sm:$0xff]
    %vm210 = vcmask 261120
    %v212 = vsel %vm210, 0.0, 0
    %214 = vmatprep.subr.mxu0 0.0
    %215 = vmatpush1.msra.mxu0 0.0
    %216 = vmatprep.subr.mxu0 0.0
    %217 = vmatpush1.msra.mxu0 0.0
    %218 = vmatprep.subr.mxu0 0.0
    %219 = vmatpush1.msra.mxu0 0.0
    %220 = vmatprep.subr.mxu0 0.0
    %221 = vmatpush1.msra.mxu0 0.0
    %222 = vmatprep.subr.mxu0 0.0
    %223 = vmatpush1.msra.mxu0 0.0
    %224 = vmatprep.subr.mxu0 0.0
    %225 = vmatpush1.msra.mxu0 0.0
    %226 = vmatprep.subr.mxu0 0.0
    %227 = vmatpush1.msra.mxu0 0.0
    %228 = vmatprep.subr.mxu0 0.0
    %229 = vmatpush1.msra.mxu0 0.0
    %230 = vmatprep.subr.mxu0 0.0
    %231 = vmatpush1.msra.mxu0 0.0
    %232 = vmatprep.subr.mxu0 0.0
    %233 = vmatpush1.msra.mxu0 0.0
    %234 = vmatprep.subr.mxu0 0.0
    %235 = vmatpush1.msra.mxu0 0.0
    %236 = vmatprep.subr.mxu0 0.0
    %237 = vmatpush1.msra.mxu0 0.0
    %238 = vmatprep.subr.mxu0 0.0
    %239 = vmatpush1.msra.mxu0 %v209
    %240 = vmatprep.subr.mxu0 0.0
    %241 = vmatpush1.msra.mxu0 %v208
    %242 = vmatprep.subr.mxu0 0.0
    %243 = vmatpush1.msra.mxu0 %v207
    %244 = vmatprep.subr.mxu0 0.0
    %245 = vmatpush1.msra.mxu0 %v206
    %246 = vmatprep.subr.mxu0 0.0
    %247 = vmatpush2.msra.mxu0 0.0
    %248 = vmatprep.subr.mxu0 0.0
    %249 = vmatpush2.msra.mxu0 0.0
    %250 = vmatprep.subr.mxu0 0.0
    %251 = vmatpush2.msra.mxu0 0.0
    %252 = vmatprep.subr.mxu0 0.0
    %253 = vmatpush2.msra.mxu0 0.0
    %254 = vmatprep.subr.mxu0 0.0
    %255 = vmatpush2.msra.mxu0 0.0
    %256 = vmatprep.subr.mxu0 0.0
    %257 = vmatpush2.msra.mxu0 0.0
    %258 = vmatprep.subr.mxu0 0.0
    %259 = vmatpush2.msra.mxu0 0.0
    %260 = vmatprep.subr.mxu0 0.0
    %261 = vmatpush2.msra.mxu0 0.0
    %262 = vmatprep.subr.mxu0 0.0
    %263 = vmatpush2.msra.mxu0 0.0
    %264 = vmatprep.subr.mxu0 0.0
    %265 = vmatpush2.msra.mxu0 0.0
    %266 = vmatprep.subr.mxu0 0.0
    %267 = vmatpush2.msra.mxu0 0.0
    %268 = vmatprep.subr.mxu0 0.0
    %269 = vmatpush2.msra.mxu0 0.0
    %270 = vmatprep.subr.mxu0 0.0
    %271 = vmatpush2.msra.mxu0 0.0
    %272 = vmatprep.subr.mxu0 0.0
    %273 = vmatpush2.msra.mxu0 0.0
    %274 = vmatprep.subr.mxu0 0.0
    %275 = vmatpush2.msra.mxu0 0.0
    %276 = vmatprep.subr.mxu0 0.0
    %277 = vmatpush2.msra.mxu0 0.0
    %278 = vmatprep.mubr.f32.mxu0 0.0
    %279 = vmatmul.mubr.f32.gmra.mxu0 %v212
    %v280 = vpop.f32.mrf.mxu0
    %v281 = vadd.f32 0.0, %v280
    %v282 = vpop.f32.mrf.mxu0
    %283 = vdwg.mxu0
    %v285 = vrot.slane %v281, 1
    %v286 = vrot.slane %v281, 2
    %v287 = vrot.slane %v281, 3
    %v288 = vrot.slane %v281, 4
    %v289 = vrot.slane %v281, 5
    %v290 = vrot.slane %v281, 6
    %v291 = vrot.slane %v281, 7
    %v300 = vadd.f32 %v168, %v281
    %v301 = vadd.f32 %v173, %v285
    %v302 = vadd.f32 %v178, %v286
    %v303 = vadd.f32 %v183, %v287
    %v304 = vadd.f32 %v188, %v288
    %v305 = vadd.f32 %v193, %v289
    %v306 = vadd.f32 %v198, %v290
    %v307 = vadd.f32 %v203, %v291
    %v308 = vxor.u32 %v300, 2147483648
    %v309 = vxor.u32 %v301, 2147483648
    %v310 = vxor.u32 %v302, 2147483648
    %v311 = vxor.u32 %v303, 2147483648
    %v312 = vxor.u32 %v304, 2147483648
    %v313 = vxor.u32 %v305, 2147483648
    %v314 = vxor.u32 %v306, 2147483648
    %v315 = vxor.u32 %v307, 2147483648
    %v316 = vmul.f32 %v308, 1.442695
    %v317 = vpow.pop %v316
    %v318 = vmul.f32 %v309, 1.442695
    %v319 = vpow.pop %v318
    %v320 = vmul.f32 %v310, 1.442695
    %v321 = vpow.pop %v320
    %v322 = vmul.f32 %v311, 1.442695
    %v323 = vpow.pop %v322
    %v324 = vmul.f32 %v312, 1.442695
    %v325 = vpow.pop %v324
    %v326 = vmul.f32 %v313, 1.442695
    %v327 = vpow.pop %v326
    %v328 = vmul.f32 %v314, 1.442695
    %v329 = vpow.pop %v328
    %v330 = vmul.f32 %v315, 1.442695
    %v331 = vpow.pop %v330
    %v332 = vadd.f32 %v317, 1.0
    %v333 = vadd.f32 %v319, 1.0
    %v334 = vadd.f32 %v321, 1.0
    %v335 = vadd.f32 %v323, 1.0
    %v336 = vadd.f32 %v325, 1.0
    %v337 = vadd.f32 %v327, 1.0
    %v338 = vadd.f32 %v329, 1.0
    %v339 = vadd.f32 %v331, 1.0
    %v340 = vrcp.pop %v332
    %v341 = vmul.f32 1.0, %v340
    %v342 = vrcp.pop %v333
    %v343 = vmul.f32 1.0, %v342
    %v344 = vrcp.pop %v334
    %v345 = vmul.f32 1.0, %v344
    %v346 = vrcp.pop %v335
    %v347 = vmul.f32 1.0, %v346
    %v348 = vrcp.pop %v336
    %v349 = vmul.f32 1.0, %v348
    %v350 = vrcp.pop %v337
    %v351 = vmul.f32 1.0, %v350
    %v352 = vrcp.pop %v338
    %v353 = vmul.f32 1.0, %v352
    %v354 = vrcp.pop %v339
    %v355 = vmul.f32 1.0, %v354
    %v356 = vtanh.pop %v300
    %v357 = vtanh.pop %v301
    %v358 = vtanh.pop %v302
    %v359 = vtanh.pop %v303
    %v360 = vtanh.pop %v304
    %v361 = vtanh.pop %v305
    %v362 = vtanh.pop %v306
    %v363 = vtanh.pop %v307
    %v364 = vmul.f32 %v341, 0.0
    %v365 = vmul.f32 %v343, 0.0
    %v366 = vmul.f32 %v345, 0.0
    %v367 = vmul.f32 %v347, 0.0
    %v368 = vmul.f32 %v349, 0.0
    %v369 = vmul.f32 %v351, 0.0
    %v370 = vmul.f32 %v353, 0.0
    %v371 = vmul.f32 %v355, 0.0
    %380 = vrot.lane.b32.xlu0 %v356, 64
    %v381 = vpop.permute.xlu0 %380
    %382 = vrot.lane.b32.xlu0 %v357, 64
    %v383 = vpop.permute.xlu0 %382
    %384 = vrot.lane.b32.xlu0 %v358, 64
    %v385 = vpop.permute.xlu0 %384
    %386 = vrot.lane.b32.xlu0 %v359, 64
    %v387 = vpop.permute.xlu0 %386
    %388 = vrot.lane.b32.xlu0 %v360, 64
    %v389 = vpop.permute.xlu0 %388
    %390 = vrot.lane.b32.xlu0 %v361, 64
    %v391 = vpop.permute.xlu0 %390
    %392 = vrot.lane.b32.xlu0 %v362, 64
    %v393 = vpop.permute.xlu0 %392
    %394 = vrot.lane.b32.xlu0 %v363, 64
    %v395 = vpop.permute.xlu0 %394
    %v404 = vmul.f32 %v341, %v381
    %v405 = vmul.f32 %v343, %v383
    %v406 = vmul.f32 %v345, %v385
    %v407 = vmul.f32 %v347, %v387
    %v408 = vmul.f32 %v349, %v389
    %v409 = vmul.f32 %v351, %v391
    %v410 = vmul.f32 %v353, %v393
    %v411 = vmul.f32 %v355, %v395
    %420 = vrot.lane.b32.xlu0 %v404, 32
    %v421 = vpop.permute.xlu0 %420
    %422 = vrot.lane.b32.xlu0 %v405, 32
    %v423 = vpop.permute.xlu0 %422
    %424 = vrot.lane.b32.xlu0 %v406, 32
    %v425 = vpop.permute.xlu0 %424
    %426 = vrot.lane.b32.xlu0 %v407, 32
    %v427 = vpop.permute.xlu0 %426
    %428 = vrot.lane.b32.xlu0 %v408, 32
    %v429 = vpop.permute.xlu0 %428
    %430 = vrot.lane.b32.xlu0 %v409, 32
    %v431 = vpop.permute.xlu0 %430
    %432 = vrot.lane.b32.xlu0 %v410, 32
    %v433 = vpop.permute.xlu0 %432
    %434 = vrot.lane.b32.xlu0 %v411, 32
    %v435 = vpop.permute.xlu0 %434
    %v444 = vadd.f32 %v364, %v421
    %v445 = vadd.f32 %v365, %v423
    %v446 = vadd.f32 %v366, %v425
    %v447 = vadd.f32 %v367, %v427
    %v448 = vadd.f32 %v368, %v429
    %v449 = vadd.f32 %v369, %v431
    %v450 = vadd.f32 %v370, %v433
    %v451 = vadd.f32 %v371, %v435
    %v452 = vtanh.pop %v444
    %v453 = vtanh.pop %v445
    %v454 = vtanh.pop %v446
    %v455 = vtanh.pop %v447
    %v456 = vtanh.pop %v448
    %v457 = vtanh.pop %v449
    %v458 = vtanh.pop %v450
    %v459 = vtanh.pop %v451
    %468 = vrot.lane.b32.xlu0 %v452, 64
    %v469 = vpop.permute.xlu0 %468
    %470 = vrot.lane.b32.xlu0 %v453, 64
    %v471 = vpop.permute.xlu0 %470
    %472 = vrot.lane.b32.xlu0 %v454, 64
    %v473 = vpop.permute.xlu0 %472
    %474 = vrot.lane.b32.xlu0 %v455, 64
    %v475 = vpop.permute.xlu0 %474
    %476 = vrot.lane.b32.xlu0 %v456, 64
    %v477 = vpop.permute.xlu0 %476
    %478 = vrot.lane.b32.xlu0 %v457, 64
    %v479 = vpop.permute.xlu0 %478
    %480 = vrot.lane.b32.xlu0 %v458, 64
    %v481 = vpop.permute.xlu0 %480
    %482 = vrot.lane.b32.xlu0 %v459, 64
    %v483 = vpop.permute.xlu0 %482
    %v492 = vmul.f32 %v341, %v469
    %v493 = vmul.f32 %v343, %v471
    %v494 = vmul.f32 %v345, %v473
    %v495 = vmul.f32 %v347, %v475
    %v496 = vmul.f32 %v349, %v477
    %v497 = vmul.f32 %v351, %v479
    %v498 = vmul.f32 %v353, %v481
    %v499 = vmul.f32 %v355, %v483
    %v500 = vadd.f32 %v492, 0.0
    %v501 = vadd.f32 %v493, 0.0
    %v502 = vadd.f32 %v494, 0.0
    %v503 = vadd.f32 %v495, 0.0
    %v504 = vadd.f32 %v496, 0.0
    %v505 = vadd.f32 %v497, 0.0
    %v506 = vadd.f32 %v498, 0.0
    %v507 = vadd.f32 %v499, 0.0
    %v516 = vrot.slane %v493, 7
    %vm517 = vcmask 1041409
    %v518 = vsel %vm517, %v516, %v492
    %v519 = vrot.slane %v494, 6
    %vm520 = vcmask 1042434
    %v521 = vsel %vm520, %v519, %v518
    %v522 = vrot.slane %v495, 5
    %vm523 = vcmask 1043459
    %v524 = vsel %vm523, %v522, %v521
    %v525 = vrot.slane %v496, 4
    %vm526 = vcmask 1044484
    %v527 = vsel %vm526, %v525, %v524
    %v528 = vrot.slane %v497, 3
    %vm529 = vcmask 1045509
    %v530 = vsel %vm529, %v528, %v527
    %v531 = vrot.slane %v498, 2
    %vm532 = vcmask 1046534
    %v533 = vsel %vm532, %v531, %v530
    %v534 = vrot.slane %v499, 1
    %vm535 = vcmask 1047559
    %v536 = vsel %vm535, %v534, %v533
    %537 = vrot.lane.b32.xlu0 %v536, 32
    %v538 = vpop.permute.xlu0 %537
    %v539 = vsel %vm210, %v538, 0
    %541 = vmatprep.subr.mxu0 0.0
    %542 = vmatpush1.msra.mxu0 0.0
    %543 = vmatprep.subr.mxu0 0.0
    %544 = vmatpush1.msra.mxu0 0.0
    %545 = vmatprep.subr.mxu0 0.0
    %546 = vmatpush1.msra.mxu0 0.0
    %547 = vmatprep.subr.mxu0 0.0
    %548 = vmatpush1.msra.mxu0 0.0
    %549 = vmatprep.subr.mxu0 0.0
    %550 = vmatpush1.msra.mxu0 0.0
    %551 = vmatprep.subr.mxu0 0.0
    %552 = vmatpush1.msra.mxu0 0.0
    %553 = vmatprep.subr.mxu0 0.0
    %554 = vmatpush1.msra.mxu0 0.0
    %555 = vmatprep.subr.mxu0 0.0
    %556 = vmatpush1.msra.mxu0 0.0
    %557 = vmatprep.subr.mxu0 0.0
    %558 = vmatpush1.msra.mxu0 0.0
    %559 = vmatprep.subr.mxu0 0.0
    %560 = vmatpush1.msra.mxu0 0.0
    %561 = vmatprep.subr.mxu0 0.0
    %562 = vmatpush1.msra.mxu0 0.0
    %563 = vmatprep.subr.mxu0 0.0
    %564 = vmatpush1.msra.mxu0 0.0
    %565 = vmatprep.subr.mxu0 0.0
    %566 = vmatpush1.msra.mxu0 %v209
    %567 = vmatprep.subr.mxu0 0.0
    %568 = vmatpush1.msra.mxu0 %v208
    %569 = vmatprep.subr.mxu0 0.0
    %570 = vmatpush1.msra.mxu0 %v207
    %571 = vmatprep.subr.mxu0 0.0
    %572 = vmatpush1.msra.mxu0 %v206
    %573 = vmatprep.subr.mxu0 0.0
    %574 = vmatpush2.msra.mxu0 0.0
    %575 = vmatprep.subr.mxu0 0.0
    %576 = vmatpush2.msra.mxu0 0.0
    %577 = vmatprep.subr.mxu0 0.0
    %578 = vmatpush2.msra.mxu0 0.0
    %579 = vmatprep.subr.mxu0 0.0
    %580 = vmatpush2.msra.mxu0 0.0
    %581 = vmatprep.subr.mxu0 0.0
    %582 = vmatpush2.msra.mxu0 0.0
    %583 = vmatprep.subr.mxu0 0.0
    %584 = vmatpush2.msra.mxu0 0.0
    %585 = vmatprep.subr.mxu0 0.0
    %586 = vmatpush2.msra.mxu0 0.0
    %587 = vmatprep.subr.mxu0 0.0
    %588 = vmatpush2.msra.mxu0 0.0
    %589 = vmatprep.subr.mxu0 0.0
    %590 = vmatpush2.msra.mxu0 0.0
    %591 = vmatprep.subr.mxu0 0.0
    %592 = vmatpush2.msra.mxu0 0.0
    %593 = vmatprep.subr.mxu0 0.0
    %594 = vmatpush2.msra.mxu0 0.0
    %595 = vmatprep.subr.mxu0 0.0
    %596 = vmatpush2.msra.mxu0 0.0
    %597 = vmatprep.subr.mxu0 0.0
    %598 = vmatpush2.msra.mxu0 0.0
    %599 = vmatprep.subr.mxu0 0.0
    %600 = vmatpush2.msra.mxu0 0.0
    %601 = vmatprep.subr.mxu0 0.0
    %602 = vmatpush2.msra.mxu0 0.0
    %603 = vmatprep.subr.mxu0 0.0
    %604 = vmatpush2.msra.mxu0 0.0
    %605 = vmatprep.mubr.f32.mxu0 0.0
    %606 = vmatmul.mubr.f32.gmra.mxu0 %v539
    %v607 = vpop.f32.mrf.mxu0
    %v608 = vadd.f32 0.0, %v607
    %v609 = vpop.f32.mrf.mxu0
    %610 = vdwg.mxu0
    %v612 = vrot.slane %v608, 7
    %v613 = vrot.slane %v608, 1
    %v614 = vrot.slane %v608, 2
    %v615 = vrot.slane %v608, 3
    %v616 = vrot.slane %v608, 4
    %v617 = vrot.slane %v608, 5
    %v618 = vrot.slane %v608, 6
    %v627 = vadd.f32 %v168, %v612
    %v628 = vadd.f32 %v173, %v608
    %v629 = vadd.f32 %v178, %v613
    %v630 = vadd.f32 %v183, %v614
    %v631 = vadd.f32 %v188, %v615
    %v632 = vadd.f32 %v193, %v616
    %v633 = vadd.f32 %v198, %v617
    %v634 = vadd.f32 %v203, %v618
    %v635 = vxor.u32 %v627, 2147483648
    %v636 = vxor.u32 %v628, 2147483648
    %v637 = vxor.u32 %v629, 2147483648
    %v638 = vxor.u32 %v630, 2147483648
    %v639 = vxor.u32 %v631, 2147483648
    %v640 = vxor.u32 %v632, 2147483648
    %v641 = vxor.u32 %v633, 2147483648
    %v642 = vxor.u32 %v634, 2147483648
    %v643 = vmul.f32 %v635, 1.442695
    %v644 = vpow.pop %v643
    %v645 = vmul.f32 %v636, 1.442695
    %v646 = vpow.pop %v645
    %v647 = vmul.f32 %v637, 1.442695
    %v648 = vpow.pop %v647
    %v649 = vmul.f32 %v638, 1.442695
    %v650 = vpow.pop %v649
    %v651 = vmul.f32 %v639, 1.442695
    %v652 = vpow.pop %v651
    %v653 = vmul.f32 %v640, 1.442695
    %v654 = vpow.pop %v653
    %v655 = vmul.f32 %v641, 1.442695
    %v656 = vpow.pop %v655
    %v657 = vmul.f32 %v642, 1.442695
    %v658 = vpow.pop %v657
    %v659 = vadd.f32 %v644, 1.0
    %v660 = vadd.f32 %v646, 1.0
    %v661 = vadd.f32 %v648, 1.0
    %v662 = vadd.f32 %v650, 1.0
    %v663 = vadd.f32 %v652, 1.0
    %v664 = vadd.f32 %v654, 1.0
    %v665 = vadd.f32 %v656, 1.0
    %v666 = vadd.f32 %v658, 1.0
    %v667 = vrcp.pop %v659
    %v668 = vmul.f32 1.0, %v667
    %v669 = vrcp.pop %v660
    %v670 = vmul.f32 1.0, %v669
    %v671 = vrcp.pop %v661
    %v672 = vmul.f32 1.0, %v671
    %v673 = vrcp.pop %v662
    %v674 = vmul.f32 1.0, %v673
    %v675 = vrcp.pop %v663
    %v676 = vmul.f32 1.0, %v675
    %v677 = vrcp.pop %v664
    %v678 = vmul.f32 1.0, %v677
    %v679 = vrcp.pop %v665
    %v680 = vmul.f32 1.0, %v679
    %v681 = vrcp.pop %v666
    %v682 = vmul.f32 1.0, %v681
    %v683 = vtanh.pop %v627
    %v684 = vtanh.pop %v628
    %v685 = vtanh.pop %v629
    %v686 = vtanh.pop %v630
    %v687 = vtanh.pop %v631
    %v688 = vtanh.pop %v632
    %v689 = vtanh.pop %v633
    %v690 = vtanh.pop %v634
    %v699 = vrot.slane %v444, 7
    %v700 = vrot.slane %v445, 7
    %v701 = vrot.slane %v446, 7
    %v702 = vrot.slane %v447, 7
    %v703 = vrot.slane %v448, 7
    %v704 = vrot.slane %v449, 7
    %v705 = vrot.slane %v450, 7
    %v706 = vrot.slane %v451, 7
    %v715 = vmul.f32 %v668, %v699
    %v716 = vmul.f32 %v670, %v700
    %v717 = vmul.f32 %v672, %v701
    %v718 = vmul.f32 %v674, %v702
    %v719 = vmul.f32 %v676, %v703
    %v720 = vmul.f32 %v678, %v704
    %v721 = vmul.f32 %v680, %v705
    %v722 = vmul.f32 %v682, %v706
    %731 = vrot.lane.b32.xlu0 %v683, 64
    %v732 = vpop.permute.xlu0 %731
    %733 = vrot.lane.b32.xlu0 %v684, 64
    %v734 = vpop.permute.xlu0 %733
    %735 = vrot.lane.b32.xlu0 %v685, 64
    %v736 = vpop.permute.xlu0 %735
    %737 = vrot.lane.b32.xlu0 %v686, 64
    %v738 = vpop.permute.xlu0 %737
    %739 = vrot.lane.b32.xlu0 %v687, 64
    %v740 = vpop.permute.xlu0 %739
    %741 = vrot.lane.b32.xlu0 %v688, 64
    %v742 = vpop.permute.xlu0 %741
    %743 = vrot.lane.b32.xlu0 %v689, 64
    %v744 = vpop.permute.xlu0 %743
    %745 = vrot.lane.b32.xlu0 %v690, 64
    %v746 = vpop.permute.xlu0 %745
    %v755 = vmul.f32 %v668, %v732
    %v756 = vmul.f32 %v670, %v734
    %v757 = vmul.f32 %v672, %v736
    %v758 = vmul.f32 %v674, %v738
    %v759 = vmul.f32 %v676, %v740
    %v760 = vmul.f32 %v678, %v742
    %v761 = vmul.f32 %v680, %v744
    %v762 = vmul.f32 %v682, %v746
    %771 = vrot.lane.b32.xlu0 %v755, 32
    %v772 = vpop.permute.xlu0 %771
    %773 = vrot.lane.b32.xlu0 %v756, 32
    %v774 = vpop.permute.xlu0 %773
    %775 = vrot.lane.b32.xlu0 %v757, 32
    %v776 = vpop.permute.xlu0 %775
    %777 = vrot.lane.b32.xlu0 %v758, 32
    %v778 = vpop.permute.xlu0 %777
    %779 = vrot.lane.b32.xlu0 %v759, 32
    %v780 = vpop.permute.xlu0 %779
    %781 = vrot.lane.b32.xlu0 %v760, 32
    %v782 = vpop.permute.xlu0 %781
    %783 = vrot.lane.b32.xlu0 %v761, 32
    %v784 = vpop.permute.xlu0 %783
    %785 = vrot.lane.b32.xlu0 %v762, 32
    %v786 = vpop.permute.xlu0 %785
    %v795 = vadd.f32 %v715, %v772
    %v796 = vadd.f32 %v716, %v774
    %v797 = vadd.f32 %v717, %v776
    %v798 = vadd.f32 %v718, %v778
    %v799 = vadd.f32 %v719, %v780
    %v800 = vadd.f32 %v720, %v782
    %v801 = vadd.f32 %v721, %v784
    %v802 = vadd.f32 %v722, %v786
    %v803 = vtanh.pop %v795
    %v804 = vtanh.pop %v796
    %v805 = vtanh.pop %v797
    %v806 = vtanh.pop %v798
    %v807 = vtanh.pop %v799
    %v808 = vtanh.pop %v800
    %v809 = vtanh.pop %v801
    %v810 = vtanh.pop %v802
    %819 = vrot.lane.b32.xlu0 %v803, 64
    %v820 = vpop.permute.xlu0 %819
    %821 = vrot.lane.b32.xlu0 %v804, 64
    %v822 = vpop.permute.xlu0 %821
    %823 = vrot.lane.b32.xlu0 %v805, 64
    %v824 = vpop.permute.xlu0 %823
    %825 = vrot.lane.b32.xlu0 %v806, 64
    %v826 = vpop.permute.xlu0 %825
    %827 = vrot.lane.b32.xlu0 %v807, 64
    %v828 = vpop.permute.xlu0 %827
    %829 = vrot.lane.b32.xlu0 %v808, 64
    %v830 = vpop.permute.xlu0 %829
    %831 = vrot.lane.b32.xlu0 %v809, 64
    %v832 = vpop.permute.xlu0 %831
    %833 = vrot.lane.b32.xlu0 %v810, 64
    %v834 = vpop.permute.xlu0 %833
    %v843 = vmul.f32 %v668, %v820
    %v844 = vmul.f32 %v670, %v822
    %v845 = vmul.f32 %v672, %v824
    %v846 = vmul.f32 %v674, %v826
    %v847 = vmul.f32 %v676, %v828
    %v848 = vmul.f32 %v678, %v830
    %v849 = vmul.f32 %v680, %v832
    %v850 = vmul.f32 %v682, %v834
    %v859 = vrot.slane %v843, 1
    %v860 = vrot.slane %v844, 1
    %v861 = vrot.slane %v845, 1
    %v862 = vrot.slane %v846, 1
    %v863 = vrot.slane %v847, 1
    %v864 = vrot.slane %v848, 1
    %v865 = vrot.slane %v849, 1
    %v866 = vrot.slane %v850, 1
    %v875 = vadd.f32 %v500, %v859
    %v876 = vadd.f32 %v501, %v860
    %v877 = vadd.f32 %v502, %v861
    %v878 = vadd.f32 %v503, %v862
    %v879 = vadd.f32 %v504, %v863
    %v880 = vadd.f32 %v505, %v864
    %v881 = vadd.f32 %v506, %v865
    %v882 = vadd.f32 %v507, %v866
    %v883 = vsel %vm517, %v844, %v859
    %v884 = vrot.slane %v845, 7
    %v885 = vsel %vm520, %v884, %v883
    %v886 = vrot.slane %v846, 6
    %v887 = vsel %vm523, %v886, %v885
    %v888 = vrot.slane %v847, 5
    %v889 = vsel %vm526, %v888, %v887
    %v890 = vrot.slane %v848, 4
    %v891 = vsel %vm529, %v890, %v889
    %v892 = vrot.slane %v849, 3
    %v893 = vsel %vm532, %v892, %v891
    %v894 = vrot.slane %v850, 2
    %v895 = vsel %vm535, %v894, %v893
    %896 = vrot.lane.b32.xlu0 %v895, 32
    %v897 = vpop.permute.xlu0 %896
    %v898 = vsel %vm210, %v897, 0
    %900 = vmatprep.subr.mxu0 0.0
    %901 = vmatpush1.msra.mxu0 0.0
    %902 = vmatprep.subr.mxu0 0.0
    %903 = vmatpush1.msra.mxu0 0.0
    %904 = vmatprep.subr.mxu0 0.0
    %905 = vmatpush1.msra.mxu0 0.0
    %906 = vmatprep.subr.mxu0 0.0
    %907 = vmatpush1.msra.mxu0 0.0
    %908 = vmatprep.subr.mxu0 0.0
    %909 = vmatpush1.msra.mxu0 0.0
    %910 = vmatprep.subr.mxu0 0.0
    %911 = vmatpush1.msra.mxu0 0.0
    %912 = vmatprep.subr.mxu0 0.0
    %913 = vmatpush1.msra.mxu0 0.0
    %914 = vmatprep.subr.mxu0 0.0
    %915 = vmatpush1.msra.mxu0 0.0
    %916 = vmatprep.subr.mxu0 0.0
    %917 = vmatpush1.msra.mxu0 0.0
    %918 = vmatprep.subr.mxu0 0.0
    %919 = vmatpush1.msra.mxu0 0.0
    %920 = vmatprep.subr.mxu0 0.0
    %921 = vmatpush1.msra.mxu0 0.0
    %922 = vmatprep.subr.mxu0 0.0
    %923 = vmatpush1.msra.mxu0 0.0
    %924 = vmatprep.subr.mxu0 0.0
    %925 = vmatpush1.msra.mxu0 %v209
    %926 = vmatprep.subr.mxu0 0.0
    %927 = vmatpush1.msra.mxu0 %v208
    %928 = vmatprep.subr.mxu0 0.0
    %929 = vmatpush1.msra.mxu0 %v207
    %930 = vmatprep.subr.mxu0 0.0
    %931 = vmatpush1.msra.mxu0 %v206
    %932 = vmatprep.subr.mxu0 0.0
    %933 = vmatpush2.msra.mxu0 0.0
    %934 = vmatprep.subr.mxu0 0.0
    %935 = vmatpush2.msra.mxu0 0.0
    %936 = vmatprep.subr.mxu0 0.0
    %937 = vmatpush2.msra.mxu0 0.0
    %938 = vmatprep.subr.mxu0 0.0
    %939 = vmatpush2.msra.mxu0 0.0
    %940 = vmatprep.subr.mxu0 0.0
    %941 = vmatpush2.msra.mxu0 0.0
    %942 = vmatprep.subr.mxu0 0.0
    %943 = vmatpush2.msra.mxu0 0.0
    %944 = vmatprep.subr.mxu0 0.0
    %945 = vmatpush2.msra.mxu0 0.0
    %946 = vmatprep.subr.mxu0 0.0
    %947 = vmatpush2.msra.mxu0 0.0
    %948 = vmatprep.subr.mxu0 0.0
    %949 = vmatpush2.msra.mxu0 0.0
    %950 = vmatprep.subr.mxu0 0.0
    %951 = vmatpush2.msra.mxu0 0.0
    %952 = vmatprep.subr.mxu0 0.0
    %953 = vmatpush2.msra.mxu0 0.0
    %954 = vmatprep.subr.mxu0 0.0
    %955 = vmatpush2.msra.mxu0 0.0
    %956 = vmatprep.subr.mxu0 0.0
    %957 = vmatpush2.msra.mxu0 0.0
    %958 = vmatprep.subr.mxu0 0.0
    %959 = vmatpush2.msra.mxu0 0.0
    %960 = vmatprep.subr.mxu0 0.0
    %961 = vmatpush2.msra.mxu0 0.0
    %962 = vmatprep.subr.mxu0 0.0
    %963 = vmatpush2.msra.mxu0 0.0
    %964 = vmatprep.mubr.f32.mxu0 0.0
    %965 = vmatmul.mubr.f32.gmra.mxu0 %v898
    %v966 = vpop.f32.mrf.mxu0
    %v967 = vadd.f32 0.0, %v966
    %v968 = vpop.f32.mrf.mxu0
    %969 = vdwg.mxu0
    %v971 = vrot.slane %v967, 6
    %v972 = vrot.slane %v967, 7
    %v973 = vrot.slane %v967, 1
    %v974 = vrot.slane %v967, 2
    %v975 = vrot.slane %v967, 3
    %v976 = vrot.slane %v967, 4
    %v977 = vrot.slane %v967, 5
    %v986 = vadd.f32 %v168, %v971
    %v987 = vadd.f32 %v173, %v972
    %v988 = vadd.f32 %v178, %v967
    %v989 = vadd.f32 %v183, %v973
    %v990 = vadd.f32 %v188, %v974
    %v991 = vadd.f32 %v193, %v975
    %v992 = vadd.f32 %v198, %v976
    %v993 = vadd.f32 %v203, %v977
    %v994 = vxor.u32 %v986, 2147483648
    %v995 = vxor.u32 %v987, 2147483648
    %v996 = vxor.u32 %v988, 2147483648
    %v997 = vxor.u32 %v989, 2147483648
    %v998 = vxor.u32 %v990, 2147483648
    %v999 = vxor.u32 %v991, 2147483648
    %v1000 = vxor.u32 %v992, 2147483648
    %v1001 = vxor.u32 %v993, 2147483648
    %v1002 = vmul.f32 %v994, 1.442695
    %v1003 = vpow.pop %v1002
    %v1004 = vmul.f32 %v995, 1.442695
    %v1005 = vpow.pop %v1004
    %v1006 = vmul.f32 %v996, 1.442695
    %v1007 = vpow.pop %v1006
    %v1008 = vmul.f32 %v997, 1.442695
    %v1009 = vpow.pop %v1008
    %v1010 = vmul.f32 %v998, 1.442695
    %v1011 = vpow.pop %v1010
    %v1012 = vmul.f32 %v999, 1.442695
    %v1013 = vpow.pop %v1012
    %v1014 = vmul.f32 %v1000, 1.442695
    %v1015 = vpow.pop %v1014
    %v1016 = vmul.f32 %v1001, 1.442695
    %v1017 = vpow.pop %v1016
    %v1018 = vadd.f32 %v1003, 1.0
    %v1019 = vadd.f32 %v1005, 1.0
    %v1020 = vadd.f32 %v1007, 1.0
    %v1021 = vadd.f32 %v1009, 1.0
    %v1022 = vadd.f32 %v1011, 1.0
    %v1023 = vadd.f32 %v1013, 1.0
    %v1024 = vadd.f32 %v1015, 1.0
    %v1025 = vadd.f32 %v1017, 1.0
    %v1026 = vrcp.pop %v1018
    %v1027 = vmul.f32 1.0, %v1026
    %v1028 = vrcp.pop %v1019
    %v1029 = vmul.f32 1.0, %v1028
    %v1030 = vrcp.pop %v1020
    %v1031 = vmul.f32 1.0, %v1030
    %v1032 = vrcp.pop %v1021
    %v1033 = vmul.f32 1.0, %v1032
    %v1034 = vrcp.pop %v1022
    %v1035 = vmul.f32 1.0, %v1034
    %v1036 = vrcp.pop %v1023
    %v1037 = vmul.f32 1.0, %v1036
    %v1038 = vrcp.pop %v1024
    %v1039 = vmul.f32 1.0, %v1038
    %v1040 = vrcp.pop %v1025
    %v1041 = vmul.f32 1.0, %v1040
    %v1042 = vtanh.pop %v986
    %v1043 = vtanh.pop %v987
    %v1044 = vtanh.pop %v988
    %v1045 = vtanh.pop %v989
    %v1046 = vtanh.pop %v990
    %v1047 = vtanh.pop %v991
    %v1048 = vtanh.pop %v992
    %v1049 = vtanh.pop %v993
    %v1058 = vrot.slane %v795, 7
    %v1059 = vrot.slane %v796, 7
    %v1060 = vrot.slane %v797, 7
    %v1061 = vrot.slane %v798, 7
    %v1062 = vrot.slane %v799, 7
    %v1063 = vrot.slane %v800, 7
    %v1064 = vrot.slane %v801, 7
    %v1065 = vrot.slane %v802, 7
    %v1074 = vmul.f32 %v1027, %v1058
    %v1075 = vmul.f32 %v1029, %v1059
    %v1076 = vmul.f32 %v1031, %v1060
    %v1077 = vmul.f32 %v1033, %v1061
    %v1078 = vmul.f32 %v1035, %v1062
    %v1079 = vmul.f32 %v1037, %v1063
    %v1080 = vmul.f32 %v1039, %v1064
    %v1081 = vmul.f32 %v1041, %v1065
    %1090 = vrot.lane.b32.xlu0 %v1042, 64
    %v1091 = vpop.permute.xlu0 %1090
    %1092 = vrot.lane.b32.xlu0 %v1043, 64
    %v1093 = vpop.permute.xlu0 %1092
    %1094 = vrot.lane.b32.xlu0 %v1044, 64
    %v1095 = vpop.permute.xlu0 %1094
    %1096 = vrot.lane.b32.xlu0 %v1045, 64
    %v1097 = vpop.permute.xlu0 %1096
    %1098 = vrot.lane.b32.xlu0 %v1046, 64
    %v1099 = vpop.permute.xlu0 %1098
    %1100 = vrot.lane.b32.xlu0 %v1047, 64
    %v1101 = vpop.permute.xlu0 %1100
    %1102 = vrot.lane.b32.xlu0 %v1048, 64
    %v1103 = vpop.permute.xlu0 %1102
    %1104 = vrot.lane.b32.xlu0 %v1049, 64
    %v1105 = vpop.permute.xlu0 %1104
    %v1114 = vmul.f32 %v1027, %v1091
    %v1115 = vmul.f32 %v1029, %v1093
    %v1116 = vmul.f32 %v1031, %v1095
    %v1117 = vmul.f32 %v1033, %v1097
    %v1118 = vmul.f32 %v1035, %v1099
    %v1119 = vmul.f32 %v1037, %v1101
    %v1120 = vmul.f32 %v1039, %v1103
    %v1121 = vmul.f32 %v1041, %v1105
    %1130 = vrot.lane.b32.xlu0 %v1114, 32
    %v1131 = vpop.permute.xlu0 %1130
    %1132 = vrot.lane.b32.xlu0 %v1115, 32
    %v1133 = vpop.permute.xlu0 %1132
    %1134 = vrot.lane.b32.xlu0 %v1116, 32
    %v1135 = vpop.permute.xlu0 %1134
    %1136 = vrot.lane.b32.xlu0 %v1117, 32
    %v1137 = vpop.permute.xlu0 %1136
    %1138 = vrot.lane.b32.xlu0 %v1118, 32
    %v1139 = vpop.permute.xlu0 %1138
    %1140 = vrot.lane.b32.xlu0 %v1119, 32
    %v1141 = vpop.permute.xlu0 %1140
    %1142 = vrot.lane.b32.xlu0 %v1120, 32
    %v1143 = vpop.permute.xlu0 %1142
    %1144 = vrot.lane.b32.xlu0 %v1121, 32
    %v1145 = vpop.permute.xlu0 %1144
    %v1154 = vadd.f32 %v1074, %v1131
    %v1155 = vadd.f32 %v1075, %v1133
    %v1156 = vadd.f32 %v1076, %v1135
    %v1157 = vadd.f32 %v1077, %v1137
    %v1158 = vadd.f32 %v1078, %v1139
    %v1159 = vadd.f32 %v1079, %v1141
    %v1160 = vadd.f32 %v1080, %v1143
    %v1161 = vadd.f32 %v1081, %v1145
    %v1162 = vtanh.pop %v1154
    %v1163 = vtanh.pop %v1155
    %v1164 = vtanh.pop %v1156
    %v1165 = vtanh.pop %v1157
    %v1166 = vtanh.pop %v1158
    %v1167 = vtanh.pop %v1159
    %v1168 = vtanh.pop %v1160
    %v1169 = vtanh.pop %v1161
    %1178 = vrot.lane.b32.xlu0 %v1162, 64
    %v1179 = vpop.permute.xlu0 %1178
    %1180 = vrot.lane.b32.xlu0 %v1163, 64
    %v1181 = vpop.permute.xlu0 %1180
    %1182 = vrot.lane.b32.xlu0 %v1164, 64
    %v1183 = vpop.permute.xlu0 %1182
    %1184 = vrot.lane.b32.xlu0 %v1165, 64
    %v1185 = vpop.permute.xlu0 %1184
    %1186 = vrot.lane.b32.xlu0 %v1166, 64
    %v1187 = vpop.permute.xlu0 %1186
    %1188 = vrot.lane.b32.xlu0 %v1167, 64
    %v1189 = vpop.permute.xlu0 %1188
    %1190 = vrot.lane.b32.xlu0 %v1168, 64
    %v1191 = vpop.permute.xlu0 %1190
    %1192 = vrot.lane.b32.xlu0 %v1169, 64
    %v1193 = vpop.permute.xlu0 %1192
    %v1202 = vmul.f32 %v1027, %v1179
    %v1203 = vmul.f32 %v1029, %v1181
    %v1204 = vmul.f32 %v1031, %v1183
    %v1205 = vmul.f32 %v1033, %v1185
    %v1206 = vmul.f32 %v1035, %v1187
    %v1207 = vmul.f32 %v1037, %v1189
    %v1208 = vmul.f32 %v1039, %v1191
    %v1209 = vmul.f32 %v1041, %v1193
    %v1218 = vrot.slane %v1202, 2
    %v1219 = vrot.slane %v1203, 2
    %v1220 = vrot.slane %v1204, 2
    %v1221 = vrot.slane %v1205, 2
    %v1222 = vrot.slane %v1206, 2
    %v1223 = vrot.slane %v1207, 2
    %v1224 = vrot.slane %v1208, 2
    %v1225 = vrot.slane %v1209, 2
    %v1234 = vadd.f32 %v875, %v1218
    %v1235 = vadd.f32 %v876, %v1219
    %v1236 = vadd.f32 %v877, %v1220
    %v1237 = vadd.f32 %v878, %v1221
    %v1238 = vadd.f32 %v879, %v1222
    %v1239 = vadd.f32 %v880, %v1223
    %v1240 = vadd.f32 %v881, %v1224
    %v1241 = vadd.f32 %v882, %v1225
    %v1242 = vrot.slane %v1203, 1
    %v1243 = vsel %vm517, %v1242, %v1218
    %v1244 = vsel %vm520, %v1204, %v1243
    %v1245 = vrot.slane %v1205, 7
    %v1246 = vsel %vm523, %v1245, %v1244
    %v1247 = vrot.slane %v1206, 6
    %v1248 = vsel %vm526, %v1247, %v1246
    %v1249 = vrot.slane %v1207, 5
    %v1250 = vsel %vm529, %v1249, %v1248
    %v1251 = vrot.slane %v1208, 4
    %v1252 = vsel %vm532, %v1251, %v1250
    %v1253 = vrot.slane %v1209, 3
    %v1254 = vsel %vm535, %v1253, %v1252
    %1255 = vrot.lane.b32.xlu0 %v1254, 32
    %v1256 = vpop.permute.xlu0 %1255
    %v1257 = vsel %vm210, %v1256, 0
    %1259 = vmatprep.subr.mxu0 0.0
    %1260 = vmatpush1.msra.mxu0 0.0
    %1261 = vmatprep.subr.mxu0 0.0
    %1262 = vmatpush1.msra.mxu0 0.0
    %1263 = vmatprep.subr.mxu0 0.0
    %1264 = vmatpush1.msra.mxu0 0.0
    %1265 = vmatprep.subr.mxu0 0.0
    %1266 = vmatpush1.msra.mxu0 0.0
    %1267 = vmatprep.subr.mxu0 0.0
    %1268 = vmatpush1.msra.mxu0 0.0
    %1269 = vmatprep.subr.mxu0 0.0
    %1270 = vmatpush1.msra.mxu0 0.0
    %1271 = vmatprep.subr.mxu0 0.0
    %1272 = vmatpush1.msra.mxu0 0.0
    %1273 = vmatprep.subr.mxu0 0.0
    %1274 = vmatpush1.msra.mxu0 0.0
    %1275 = vmatprep.subr.mxu0 0.0
    %1276 = vmatpush1.msra.mxu0 0.0
    %1277 = vmatprep.subr.mxu0 0.0
    %1278 = vmatpush1.msra.mxu0 0.0
    %1279 = vmatprep.subr.mxu0 0.0
    %1280 = vmatpush1.msra.mxu0 0.0
    %1281 = vmatprep.subr.mxu0 0.0
    %1282 = vmatpush1.msra.mxu0 0.0
    %1283 = vmatprep.subr.mxu0 0.0
    %1284 = vmatpush1.msra.mxu0 %v209
    %1285 = vmatprep.subr.mxu0 0.0
    %1286 = vmatpush1.msra.mxu0 %v208
    %1287 = vmatprep.subr.mxu0 0.0
    %1288 = vmatpush1.msra.mxu0 %v207
    %1289 = vmatprep.subr.mxu0 0.0
    %1290 = vmatpush1.msra.mxu0 %v206
    %1291 = vmatprep.subr.mxu0 0.0
    %1292 = vmatpush2.msra.mxu0 0.0
    %1293 = vmatprep.subr.mxu0 0.0
    %1294 = vmatpush2.msra.mxu0 0.0
    %1295 = vmatprep.subr.mxu0 0.0
    %1296 = vmatpush2.msra.mxu0 0.0
    %1297 = vmatprep.subr.mxu0 0.0
    %1298 = vmatpush2.msra.mxu0 0.0
    %1299 = vmatprep.subr.mxu0 0.0
    %1300 = vmatpush2.msra.mxu0 0.0
    %1301 = vmatprep.subr.mxu0 0.0
    %1302 = vmatpush2.msra.mxu0 0.0
    %1303 = vmatprep.subr.mxu0 0.0
    %1304 = vmatpush2.msra.mxu0 0.0
    %1305 = vmatprep.subr.mxu0 0.0
    %1306 = vmatpush2.msra.mxu0 0.0
    %1307 = vmatprep.subr.mxu0 0.0
    %1308 = vmatpush2.msra.mxu0 0.0
    %1309 = vmatprep.subr.mxu0 0.0
    %1310 = vmatpush2.msra.mxu0 0.0
    %1311 = vmatprep.subr.mxu0 0.0
    %1312 = vmatpush2.msra.mxu0 0.0
    %1313 = vmatprep.subr.mxu0 0.0
    %1314 = vmatpush2.msra.mxu0 0.0
    %1315 = vmatprep.subr.mxu0 0.0
    %1316 = vmatpush2.msra.mxu0 0.0
    %1317 = vmatprep.subr.mxu0 0.0
    %1318 = vmatpush2.msra.mxu0 0.0
    %1319 = vmatprep.subr.mxu0 0.0
    %1320 = vmatpush2.msra.mxu0 0.0
    %1321 = vmatprep.subr.mxu0 0.0
    %1322 = vmatpush2.msra.mxu0 0.0
    %1323 = vmatprep.mubr.f32.mxu0 0.0
    %1324 = vmatmul.mubr.f32.gmra.mxu0 %v1257
    %v1325 = vpop.f32.mrf.mxu0
    %v1326 = vadd.f32 0.0, %v1325
    %v1327 = vpop.f32.mrf.mxu0
    %1328 = vdwg.mxu0
    %v1330 = vrot.slane %v1326, 5
    %v1331 = vrot.slane %v1326, 6
    %v1332 = vrot.slane %v1326, 7
    %v1333 = vrot.slane %v1326, 1
    %v1334 = vrot.slane %v1326, 2
    %v1335 = vrot.slane %v1326, 3
    %v1336 = vrot.slane %v1326, 4
    %v1345 = vadd.f32 %v168, %v1330
    %v1346 = vadd.f32 %v173, %v1331
    %v1347 = vadd.f32 %v178, %v1332
    %v1348 = vadd.f32 %v183, %v1326
    %v1349 = vadd.f32 %v188, %v1333
    %v1350 = vadd.f32 %v193, %v1334
    %v1351 = vadd.f32 %v198, %v1335
    %v1352 = vadd.f32 %v203, %v1336
    %v1353 = vxor.u32 %v1345, 2147483648
    %v1354 = vxor.u32 %v1346, 2147483648
    %v1355 = vxor.u32 %v1347, 2147483648
    %v1356 = vxor.u32 %v1348, 2147483648
    %v1357 = vxor.u32 %v1349, 2147483648
    %v1358 = vxor.u32 %v1350, 2147483648
    %v1359 = vxor.u32 %v1351, 2147483648
    %v1360 = vxor.u32 %v1352, 2147483648
    %v1361 = vmul.f32 %v1353, 1.442695
    %v1362 = vpow.pop %v1361
    %v1363 = vmul.f32 %v1354, 1.442695
    %v1364 = vpow.pop %v1363
    %v1365 = vmul.f32 %v1355, 1.442695
    %v1366 = vpow.pop %v1365
    %v1367 = vmul.f32 %v1356, 1.442695
    %v1368 = vpow.pop %v1367
    %v1369 = vmul.f32 %v1357, 1.442695
    %v1370 = vpow.pop %v1369
    %v1371 = vmul.f32 %v1358, 1.442695
    %v1372 = vpow.pop %v1371
    %v1373 = vmul.f32 %v1359, 1.442695
    %v1374 = vpow.pop %v1373
    %v1375 = vmul.f32 %v1360, 1.442695
    %v1376 = vpow.pop %v1375
    %v1377 = vadd.f32 %v1362, 1.0
    %v1378 = vadd.f32 %v1364, 1.0
    %v1379 = vadd.f32 %v1366, 1.0
    %v1380 = vadd.f32 %v1368, 1.0
    %v1381 = vadd.f32 %v1370, 1.0
    %v1382 = vadd.f32 %v1372, 1.0
    %v1383 = vadd.f32 %v1374, 1.0
    %v1384 = vadd.f32 %v1376, 1.0
    %v1385 = vrcp.pop %v1377
    %v1386 = vmul.f32 1.0, %v1385
    %v1387 = vrcp.pop %v1378
    %v1388 = vmul.f32 1.0, %v1387
    %v1389 = vrcp.pop %v1379
    %v1390 = vmul.f32 1.0, %v1389
    %v1391 = vrcp.pop %v1380
    %v1392 = vmul.f32 1.0, %v1391
    %v1393 = vrcp.pop %v1381
    %v1394 = vmul.f32 1.0, %v1393
    %v1395 = vrcp.pop %v1382
    %v1396 = vmul.f32 1.0, %v1395
    %v1397 = vrcp.pop %v1383
    %v1398 = vmul.f32 1.0, %v1397
    %v1399 = vrcp.pop %v1384
    %v1400 = vmul.f32 1.0, %v1399
    %v1401 = vtanh.pop %v1345
    %v1402 = vtanh.pop %v1346
    %v1403 = vtanh.pop %v1347
    %v1404 = vtanh.pop %v1348
    %v1405 = vtanh.pop %v1349
    %v1406 = vtanh.pop %v1350
    %v1407 = vtanh.pop %v1351
    %v1408 = vtanh.pop %v1352
    %v1417 = vrot.slane %v1154, 7
    %v1418 = vrot.slane %v1155, 7
    %v1419 = vrot.slane %v1156, 7
    %v1420 = vrot.slane %v1157, 7
    %v1421 = vrot.slane %v1158, 7
    %v1422 = vrot.slane %v1159, 7
    %v1423 = vrot.slane %v1160, 7
    %v1424 = vrot.slane %v1161, 7
    %v1433 = vmul.f32 %v1386, %v1417
    %v1434 = vmul.f32 %v1388, %v1418
    %v1435 = vmul.f32 %v1390, %v1419
    %v1436 = vmul.f32 %v1392, %v1420
    %v1437 = vmul.f32 %v1394, %v1421
    %v1438 = vmul.f32 %v1396, %v1422
    %v1439 = vmul.f32 %v1398, %v1423
    %v1440 = vmul.f32 %v1400, %v1424
    %1449 = vrot.lane.b32.xlu0 %v1401, 64
    %v1450 = vpop.permute.xlu0 %1449
    %1451 = vrot.lane.b32.xlu0 %v1402, 64
    %v1452 = vpop.permute.xlu0 %1451
    %1453 = vrot.lane.b32.xlu0 %v1403, 64
    %v1454 = vpop.permute.xlu0 %1453
    %1455 = vrot.lane.b32.xlu0 %v1404, 64
    %v1456 = vpop.permute.xlu0 %1455
    %1457 = vrot.lane.b32.xlu0 %v1405, 64
    %v1458 = vpop.permute.xlu0 %1457
    %1459 = vrot.lane.b32.xlu0 %v1406, 64
    %v1460 = vpop.permute.xlu0 %1459
    %1461 = vrot.lane.b32.xlu0 %v1407, 64
    %v1462 = vpop.permute.xlu0 %1461
    %1463 = vrot.lane.b32.xlu0 %v1408, 64
    %v1464 = vpop.permute.xlu0 %1463
    %v1473 = vmul.f32 %v1386, %v1450
    %v1474 = vmul.f32 %v1388, %v1452
    %v1475 = vmul.f32 %v1390, %v1454
    %v1476 = vmul.f32 %v1392, %v1456
    %v1477 = vmul.f32 %v1394, %v1458
    %v1478 = vmul.f32 %v1396, %v1460
    %v1479 = vmul.f32 %v1398, %v1462
    %v1480 = vmul.f32 %v1400, %v1464
    %1489 = vrot.lane.b32.xlu0 %v1473, 32
    %v1490 = vpop.permute.xlu0 %1489
    %1491 = vrot.lane.b32.xlu0 %v1474, 32
    %v1492 = vpop.permute.xlu0 %1491
    %1493 = vrot.lane.b32.xlu0 %v1475, 32
    %v1494 = vpop.permute.xlu0 %1493
    %1495 = vrot.lane.b32.xlu0 %v1476, 32
    %v1496 = vpop.permute.xlu0 %1495
    %1497 = vrot.lane.b32.xlu0 %v1477, 32
    %v1498 = vpop.permute.xlu0 %1497
    %1499 = vrot.lane.b32.xlu0 %v1478, 32
    %v1500 = vpop.permute.xlu0 %1499
    %1501 = vrot.lane.b32.xlu0 %v1479, 32
    %v1502 = vpop.permute.xlu0 %1501
    %1503 = vrot.lane.b32.xlu0 %v1480, 32
    %v1504 = vpop.permute.xlu0 %1503
    %v1513 = vadd.f32 %v1433, %v1490
    %v1514 = vadd.f32 %v1434, %v1492
    %v1515 = vadd.f32 %v1435, %v1494
    %v1516 = vadd.f32 %v1436, %v1496
    %v1517 = vadd.f32 %v1437, %v1498
    %v1518 = vadd.f32 %v1438, %v1500
    %v1519 = vadd.f32 %v1439, %v1502
    %v1520 = vadd.f32 %v1440, %v1504
    %v1521 = vtanh.pop %v1513
    %v1522 = vtanh.pop %v1514
    %v1523 = vtanh.pop %v1515
    %v1524 = vtanh.pop %v1516
    %v1525 = vtanh.pop %v1517
    %v1526 = vtanh.pop %v1518
    %v1527 = vtanh.pop %v1519
    %v1528 = vtanh.pop %v1520
    %1537 = vrot.lane.b32.xlu0 %v1521, 64
    %v1538 = vpop.permute.xlu0 %1537
    %1539 = vrot.lane.b32.xlu0 %v1522, 64
    %v1540 = vpop.permute.xlu0 %1539
    %1541 = vrot.lane.b32.xlu0 %v1523, 64
    %v1542 = vpop.permute.xlu0 %1541
    %1543 = vrot.lane.b32.xlu0 %v1524, 64
    %v1544 = vpop.permute.xlu0 %1543
    %1545 = vrot.lane.b32.xlu0 %v1525, 64
    %v1546 = vpop.permute.xlu0 %1545
    %1547 = vrot.lane.b32.xlu0 %v1526, 64
    %v1548 = vpop.permute.xlu0 %1547
    %1549 = vrot.lane.b32.xlu0 %v1527, 64
    %v1550 = vpop.permute.xlu0 %1549
    %1551 = vrot.lane.b32.xlu0 %v1528, 64
    %v1552 = vpop.permute.xlu0 %1551
    %v1561 = vmul.f32 %v1386, %v1538
    %v1562 = vmul.f32 %v1388, %v1540
    %v1563 = vmul.f32 %v1390, %v1542
    %v1564 = vmul.f32 %v1392, %v1544
    %v1565 = vmul.f32 %v1394, %v1546
    %v1566 = vmul.f32 %v1396, %v1548
    %v1567 = vmul.f32 %v1398, %v1550
    %v1568 = vmul.f32 %v1400, %v1552
    %v1577 = vrot.slane %v1561, 3
    %v1578 = vrot.slane %v1562, 3
    %v1579 = vrot.slane %v1563, 3
    %v1580 = vrot.slane %v1564, 3
    %v1581 = vrot.slane %v1565, 3
    %v1582 = vrot.slane %v1566, 3
    %v1583 = vrot.slane %v1567, 3
    %v1584 = vrot.slane %v1568, 3
    %v1593 = vadd.f32 %v1234, %v1577
    %v1594 = vadd.f32 %v1235, %v1578
    %v1595 = vadd.f32 %v1236, %v1579
    %v1596 = vadd.f32 %v1237, %v1580
    %v1597 = vadd.f32 %v1238, %v1581
    %v1598 = vadd.f32 %v1239, %v1582
    %v1599 = vadd.f32 %v1240, %v1583
    %v1600 = vadd.f32 %v1241, %v1584
    %v1601 = vrot.slane %v1562, 2
    %v1602 = vsel %vm517, %v1601, %v1577
    %v1603 = vrot.slane %v1563, 1
    %v1604 = vsel %vm520, %v1603, %v1602
    %v1605 = vsel %vm523, %v1564, %v1604
    %v1606 = vrot.slane %v1565, 7
    %v1607 = vsel %vm526, %v1606, %v1605
    %v1608 = vrot.slane %v1566, 6
    %v1609 = vsel %vm529, %v1608, %v1607
    %v1610 = vrot.slane %v1567, 5
    %v1611 = vsel %vm532, %v1610, %v1609
    %v1612 = vrot.slane %v1568, 4
    %v1613 = vsel %vm535, %v1612, %v1611
    %1614 = vrot.lane.b32.xlu0 %v1613, 32
    %v1615 = vpop.permute.xlu0 %1614
    %v1616 = vsel %vm210, %v1615, 0
    %1618 = vmatprep.subr.mxu0 0.0
    %1619 = vmatpush1.msra.mxu0 0.0
    %1620 = vmatprep.subr.mxu0 0.0
    %1621 = vmatpush1.msra.mxu0 0.0
    %1622 = vmatprep.subr.mxu0 0.0
    %1623 = vmatpush1.msra.mxu0 0.0
    %1624 = vmatprep.subr.mxu0 0.0
    %1625 = vmatpush1.msra.mxu0 0.0
    %1626 = vmatprep.subr.mxu0 0.0
    %1627 = vmatpush1.msra.mxu0 0.0
    %1628 = vmatprep.subr.mxu0 0.0
    %1629 = vmatpush1.msra.mxu0 0.0
    %1630 = vmatprep.subr.mxu0 0.0
    %1631 = vmatpush1.msra.mxu0 0.0
    %1632 = vmatprep.subr.mxu0 0.0
    %1633 = vmatpush1.msra.mxu0 0.0
    %1634 = vmatprep.subr.mxu0 0.0
    %1635 = vmatpush1.msra.mxu0 0.0
    %1636 = vmatprep.subr.mxu0 0.0
    %1637 = vmatpush1.msra.mxu0 0.0
    %1638 = vmatprep.subr.mxu0 0.0
    %1639 = vmatpush1.msra.mxu0 0.0
    %1640 = vmatprep.subr.mxu0 0.0
    %1641 = vmatpush1.msra.mxu0 0.0
    %1642 = vmatprep.subr.mxu0 0.0
    %1643 = vmatpush1.msra.mxu0 %v209
    %1644 = vmatprep.subr.mxu0 0.0
    %1645 = vmatpush1.msra.mxu0 %v208
    %1646 = vmatprep.subr.mxu0 0.0
    %1647 = vmatpush1.msra.mxu0 %v207
    %1648 = vmatprep.subr.mxu0 0.0
    %1649 = vmatpush1.msra.mxu0 %v206
    %1650 = vmatprep.subr.mxu0 0.0
    %1651 = vmatpush2.msra.mxu0 0.0
    %1652 = vmatprep.subr.mxu0 0.0
    %1653 = vmatpush2.msra.mxu0 0.0
    %1654 = vmatprep.subr.mxu0 0.0
    %1655 = vmatpush2.msra.mxu0 0.0
    %1656 = vmatprep.subr.mxu0 0.0
    %1657 = vmatpush2.msra.mxu0 0.0
    %1658 = vmatprep.subr.mxu0 0.0
    %1659 = vmatpush2.msra.mxu0 0.0
    %1660 = vmatprep.subr.mxu0 0.0
    %1661 = vmatpush2.msra.mxu0 0.0
    %1662 = vmatprep.subr.mxu0 0.0
    %1663 = vmatpush2.msra.mxu0 0.0
    %1664 = vmatprep.subr.mxu0 0.0
    %1665 = vmatpush2.msra.mxu0 0.0
    %1666 = vmatprep.subr.mxu0 0.0
    %1667 = vmatpush2.msra.mxu0 0.0
    %1668 = vmatprep.subr.mxu0 0.0
    %1669 = vmatpush2.msra.mxu0 0.0
    %1670 = vmatprep.subr.mxu0 0.0
    %1671 = vmatpush2.msra.mxu0 0.0
    %1672 = vmatprep.subr.mxu0 0.0
    %1673 = vmatpush2.msra.mxu0 0.0
    %1674 = vmatprep.subr.mxu0 0.0
    %1675 = vmatpush2.msra.mxu0 0.0
    %1676 = vmatprep.subr.mxu0 0.0
    %1677 = vmatpush2.msra.mxu0 0.0
    %1678 = vmatprep.subr.mxu0 0.0
    %1679 = vmatpush2.msra.mxu0 0.0
    %1680 = vmatprep.subr.mxu0 0.0
    %1681 = vmatpush2.msra.mxu0 0.0
    %1682 = vmatprep.mubr.f32.mxu0 0.0
    %1683 = vmatmul.mubr.f32.gmra.mxu0 %v1616
    %v1684 = vpop.f32.mrf.mxu0
    %v1685 = vadd.f32 0.0, %v1684
    %v1686 = vpop.f32.mrf.mxu0
    %1687 = vdwg.mxu0
    %v1689 = vrot.slane %v1685, 4
    %v1690 = vrot.slane %v1685, 5
    %v1691 = vrot.slane %v1685, 6
    %v1692 = vrot.slane %v1685, 7
    %v1693 = vrot.slane %v1685, 1
    %v1694 = vrot.slane %v1685, 2
    %v1695 = vrot.slane %v1685, 3
    %v1704 = vadd.f32 %v168, %v1689
    %v1705 = vadd.f32 %v173, %v1690
    %v1706 = vadd.f32 %v178, %v1691
    %v1707 = vadd.f32 %v183, %v1692
    %v1708 = vadd.f32 %v188, %v1685
    %v1709 = vadd.f32 %v193, %v1693
    %v1710 = vadd.f32 %v198, %v1694
    %v1711 = vadd.f32 %v203, %v1695
    %v1712 = vxor.u32 %v1704, 2147483648
    %v1713 = vxor.u32 %v1705, 2147483648
    %v1714 = vxor.u32 %v1706, 2147483648
    %v1715 = vxor.u32 %v1707, 2147483648
    %v1716 = vxor.u32 %v1708, 2147483648
    %v1717 = vxor.u32 %v1709, 2147483648
    %v1718 = vxor.u32 %v1710, 2147483648
    %v1719 = vxor.u32 %v1711, 2147483648
    %v1720 = vmul.f32 %v1712, 1.442695
    %v1721 = vpow.pop %v1720
    %v1722 = vmul.f32 %v1713, 1.442695
    %v1723 = vpow.pop %v1722
    %v1724 = vmul.f32 %v1714, 1.442695
    %v1725 = vpow.pop %v1724
    %v1726 = vmul.f32 %v1715, 1.442695
    %v1727 = vpow.pop %v1726
    %v1728 = vmul.f32 %v1716, 1.442695
    %v1729 = vpow.pop %v1728
    %v1730 = vmul.f32 %v1717, 1.442695
    %v1731 = vpow.pop %v1730
    %v1732 = vmul.f32 %v1718, 1.442695
    %v1733 = vpow.pop %v1732
    %v1734 = vmul.f32 %v1719, 1.442695
    %v1735 = vpow.pop %v1734
    %v1736 = vadd.f32 %v1721, 1.0
    %v1737 = vadd.f32 %v1723, 1.0
    %v1738 = vadd.f32 %v1725, 1.0
    %v1739 = vadd.f32 %v1727, 1.0
    %v1740 = vadd.f32 %v1729, 1.0
    %v1741 = vadd.f32 %v1731, 1.0
    %v1742 = vadd.f32 %v1733, 1.0
    %v1743 = vadd.f32 %v1735, 1.0
    %v1744 = vrcp.pop %v1736
    %v1745 = vmul.f32 1.0, %v1744
    %v1746 = vrcp.pop %v1737
    %v1747 = vmul.f32 1.0, %v1746
    %v1748 = vrcp.pop %v1738
    %v1749 = vmul.f32 1.0, %v1748
    %v1750 = vrcp.pop %v1739
    %v1751 = vmul.f32 1.0, %v1750
    %v1752 = vrcp.pop %v1740
    %v1753 = vmul.f32 1.0, %v1752
    %v1754 = vrcp.pop %v1741
    %v1755 = vmul.f32 1.0, %v1754
    %v1756 = vrcp.pop %v1742
    %v1757 = vmul.f32 1.0, %v1756
    %v1758 = vrcp.pop %v1743
    %v1759 = vmul.f32 1.0, %v1758
    %v1760 = vtanh.pop %v1704
    %v1761 = vtanh.pop %v1705
    %v1762 = vtanh.pop %v1706
    %v1763 = vtanh.pop %v1707
    %v1764 = vtanh.pop %v1708
    %v1765 = vtanh.pop %v1709
    %v1766 = vtanh.pop %v1710
    %v1767 = vtanh.pop %v1711
    %v1776 = vrot.slane %v1513, 7
    %v1777 = vrot.slane %v1514, 7
    %v1778 = vrot.slane %v1515, 7
    %v1779 = vrot.slane %v1516, 7
    %v1780 = vrot.slane %v1517, 7
    %v1781 = vrot.slane %v1518, 7
    %v1782 = vrot.slane %v1519, 7
    %v1783 = vrot.slane %v1520, 7
    %v1792 = vmul.f32 %v1745, %v1776
    %v1793 = vmul.f32 %v1747, %v1777
    %v1794 = vmul.f32 %v1749, %v1778
    %v1795 = vmul.f32 %v1751, %v1779
    %v1796 = vmul.f32 %v1753, %v1780
    %v1797 = vmul.f32 %v1755, %v1781
    %v1798 = vmul.f32 %v1757, %v1782
    %v1799 = vmul.f32 %v1759, %v1783
    %1808 = vrot.lane.b32.xlu0 %v1760, 64
    %v1809 = vpop.permute.xlu0 %1808
    %1810 = vrot.lane.b32.xlu0 %v1761, 64
    %v1811 = vpop.permute.xlu0 %1810
    %1812 = vrot.lane.b32.xlu0 %v1762, 64
    %v1813 = vpop.permute.xlu0 %1812
    %1814 = vrot.lane.b32.xlu0 %v1763, 64
    %v1815 = vpop.permute.xlu0 %1814
    %1816 = vrot.lane.b32.xlu0 %v1764, 64
    %v1817 = vpop.permute.xlu0 %1816
    %1818 = vrot.lane.b32.xlu0 %v1765, 64
    %v1819 = vpop.permute.xlu0 %1818
    %1820 = vrot.lane.b32.xlu0 %v1766, 64
    %v1821 = vpop.permute.xlu0 %1820
    %1822 = vrot.lane.b32.xlu0 %v1767, 64
    %v1823 = vpop.permute.xlu0 %1822
    %v1832 = vmul.f32 %v1745, %v1809
    %v1833 = vmul.f32 %v1747, %v1811
    %v1834 = vmul.f32 %v1749, %v1813
    %v1835 = vmul.f32 %v1751, %v1815
    %v1836 = vmul.f32 %v1753, %v1817
    %v1837 = vmul.f32 %v1755, %v1819
    %v1838 = vmul.f32 %v1757, %v1821
    %v1839 = vmul.f32 %v1759, %v1823
    %1848 = vrot.lane.b32.xlu0 %v1832, 32
    %v1849 = vpop.permute.xlu0 %1848
    %1850 = vrot.lane.b32.xlu0 %v1833, 32
    %v1851 = vpop.permute.xlu0 %1850
    %1852 = vrot.lane.b32.xlu0 %v1834, 32
    %v1853 = vpop.permute.xlu0 %1852
    %1854 = vrot.lane.b32.xlu0 %v1835, 32
    %v1855 = vpop.permute.xlu0 %1854
    %1856 = vrot.lane.b32.xlu0 %v1836, 32
    %v1857 = vpop.permute.xlu0 %1856
    %1858 = vrot.lane.b32.xlu0 %v1837, 32
    %v1859 = vpop.permute.xlu0 %1858
    %1860 = vrot.lane.b32.xlu0 %v1838, 32
    %v1861 = vpop.permute.xlu0 %1860
    %1862 = vrot.lane.b32.xlu0 %v1839, 32
    %v1863 = vpop.permute.xlu0 %1862
    %v1872 = vadd.f32 %v1792, %v1849
    %v1873 = vadd.f32 %v1793, %v1851
    %v1874 = vadd.f32 %v1794, %v1853
    %v1875 = vadd.f32 %v1795, %v1855
    %v1876 = vadd.f32 %v1796, %v1857
    %v1877 = vadd.f32 %v1797, %v1859
    %v1878 = vadd.f32 %v1798, %v1861
    %v1879 = vadd.f32 %v1799, %v1863
    %v1880 = vtanh.pop %v1872
    %v1881 = vtanh.pop %v1873
    %v1882 = vtanh.pop %v1874
    %v1883 = vtanh.pop %v1875
    %v1884 = vtanh.pop %v1876
    %v1885 = vtanh.pop %v1877
    %v1886 = vtanh.pop %v1878
    %v1887 = vtanh.pop %v1879
    %1896 = vrot.lane.b32.xlu0 %v1880, 64
    %v1897 = vpop.permute.xlu0 %1896
    %1898 = vrot.lane.b32.xlu0 %v1881, 64
    %v1899 = vpop.permute.xlu0 %1898
    %1900 = vrot.lane.b32.xlu0 %v1882, 64
    %v1901 = vpop.permute.xlu0 %1900
    %1902 = vrot.lane.b32.xlu0 %v1883, 64
    %v1903 = vpop.permute.xlu0 %1902
    %1904 = vrot.lane.b32.xlu0 %v1884, 64
    %v1905 = vpop.permute.xlu0 %1904
    %1906 = vrot.lane.b32.xlu0 %v1885, 64
    %v1907 = vpop.permute.xlu0 %1906
    %1908 = vrot.lane.b32.xlu0 %v1886, 64
    %v1909 = vpop.permute.xlu0 %1908
    %1910 = vrot.lane.b32.xlu0 %v1887, 64
    %v1911 = vpop.permute.xlu0 %1910
    %v1920 = vmul.f32 %v1745, %v1897
    %v1921 = vmul.f32 %v1747, %v1899
    %v1922 = vmul.f32 %v1749, %v1901
    %v1923 = vmul.f32 %v1751, %v1903
    %v1924 = vmul.f32 %v1753, %v1905
    %v1925 = vmul.f32 %v1755, %v1907
    %v1926 = vmul.f32 %v1757, %v1909
    %v1927 = vmul.f32 %v1759, %v1911
    %v1936 = vrot.slane %v1920, 4
    %v1937 = vrot.slane %v1921, 4
    %v1938 = vrot.slane %v1922, 4
    %v1939 = vrot.slane %v1923, 4
    %v1940 = vrot.slane %v1924, 4
    %v1941 = vrot.slane %v1925, 4
    %v1942 = vrot.slane %v1926, 4
    %v1943 = vrot.slane %v1927, 4
    %v1952 = vadd.f32 %v1593, %v1936
    %v1953 = vadd.f32 %v1594, %v1937
    %v1954 = vadd.f32 %v1595, %v1938
    %v1955 = vadd.f32 %v1596, %v1939
    %v1956 = vadd.f32 %v1597, %v1940
    %v1957 = vadd.f32 %v1598, %v1941
    %v1958 = vadd.f32 %v1599, %v1942
    %v1959 = vadd.f32 %v1600, %v1943
    %v1960 = vrot.slane %v1921, 3
    %v1961 = vsel %vm517, %v1960, %v1936
    %v1962 = vrot.slane %v1922, 2
    %v1963 = vsel %vm520, %v1962, %v1961
    %v1964 = vrot.slane %v1923, 1
    %v1965 = vsel %vm523, %v1964, %v1963
    %v1966 = vsel %vm526, %v1924, %v1965
    %v1967 = vrot.slane %v1925, 7
    %v1968 = vsel %vm529, %v1967, %v1966
    %v1969 = vrot.slane %v1926, 6
    %v1970 = vsel %vm532, %v1969, %v1968
    %v1971 = vrot.slane %v1927, 5
    %v1972 = vsel %vm535, %v1971, %v1970
    %1973 = vrot.lane.b32.xlu0 %v1972, 32
    %v1974 = vpop.permute.xlu0 %1973
    %v1975 = vsel %vm210, %v1974, 0
    %1977 = vmatprep.subr.mxu0 0.0
    %1978 = vmatpush1.msra.mxu0 0.0
    %1979 = vmatprep.subr.mxu0 0.0
    %1980 = vmatpush1.msra.mxu0 0.0
    %1981 = vmatprep.subr.mxu0 0.0
    %1982 = vmatpush1.msra.mxu0 0.0
    %1983 = vmatprep.subr.mxu0 0.0
    %1984 = vmatpush1.msra.mxu0 0.0
    %1985 = vmatprep.subr.mxu0 0.0
    %1986 = vmatpush1.msra.mxu0 0.0
    %1987 = vmatprep.subr.mxu0 0.0
    %1988 = vmatpush1.msra.mxu0 0.0
    %1989 = vmatprep.subr.mxu0 0.0
    %1990 = vmatpush1.msra.mxu0 0.0
    %1991 = vmatprep.subr.mxu0 0.0
    %1992 = vmatpush1.msra.mxu0 0.0
    %1993 = vmatprep.subr.mxu0 0.0
    %1994 = vmatpush1.msra.mxu0 0.0
    %1995 = vmatprep.subr.mxu0 0.0
    %1996 = vmatpush1.msra.mxu0 0.0
    %1997 = vmatprep.subr.mxu0 0.0
    %1998 = vmatpush1.msra.mxu0 0.0
    %1999 = vmatprep.subr.mxu0 0.0
    %2000 = vmatpush1.msra.mxu0 0.0
    %2001 = vmatprep.subr.mxu0 0.0
    %2002 = vmatpush1.msra.mxu0 %v209
    %2003 = vmatprep.subr.mxu0 0.0
    %2004 = vmatpush1.msra.mxu0 %v208
    %2005 = vmatprep.subr.mxu0 0.0
    %2006 = vmatpush1.msra.mxu0 %v207
    %2007 = vmatprep.subr.mxu0 0.0
    %2008 = vmatpush1.msra.mxu0 %v206
    %2009 = vmatprep.subr.mxu0 0.0
    %2010 = vmatpush2.msra.mxu0 0.0
    %2011 = vmatprep.subr.mxu0 0.0
    %2012 = vmatpush2.msra.mxu0 0.0
    %2013 = vmatprep.subr.mxu0 0.0
    %2014 = vmatpush2.msra.mxu0 0.0
    %2015 = vmatprep.subr.mxu0 0.0
    %2016 = vmatpush2.msra.mxu0 0.0
    %2017 = vmatprep.subr.mxu0 0.0
    %2018 = vmatpush2.msra.mxu0 0.0
    %2019 = vmatprep.subr.mxu0 0.0
    %2020 = vmatpush2.msra.mxu0 0.0
    %2021 = vmatprep.subr.mxu0 0.0
    %2022 = vmatpush2.msra.mxu0 0.0
    %2023 = vmatprep.subr.mxu0 0.0
    %2024 = vmatpush2.msra.mxu0 0.0
    %2025 = vmatprep.subr.mxu0 0.0
    %2026 = vmatpush2.msra.mxu0 0.0
    %2027 = vmatprep.subr.mxu0 0.0
    %2028 = vmatpush2.msra.mxu0 0.0
    %2029 = vmatprep.subr.mxu0 0.0
    %2030 = vmatpush2.msra.mxu0 0.0
    %2031 = vmatprep.subr.mxu0 0.0
    %2032 = vmatpush2.msra.mxu0 0.0
    %2033 = vmatprep.subr.mxu0 0.0
    %2034 = vmatpush2.msra.mxu0 0.0
    %2035 = vmatprep.subr.mxu0 0.0
    %2036 = vmatpush2.msra.mxu0 0.0
    %2037 = vmatprep.subr.mxu0 0.0
    %2038 = vmatpush2.msra.mxu0 0.0
    %2039 = vmatprep.subr.mxu0 0.0
    %2040 = vmatpush2.msra.mxu0 0.0
    %2041 = vmatprep.mubr.f32.mxu0 0.0
    %2042 = vmatmul.mubr.f32.gmra.mxu0 %v1975
    %v2043 = vpop.f32.mrf.mxu0
    %v2044 = vadd.f32 0.0, %v2043
    %v2045 = vpop.f32.mrf.mxu0
    %2046 = vdwg.mxu0
    %v2048 = vrot.slane %v2044, 3
    %v2049 = vrot.slane %v2044, 4
    %v2050 = vrot.slane %v2044, 5
    %v2051 = vrot.slane %v2044, 6
    %v2052 = vrot.slane %v2044, 7
    %v2053 = vrot.slane %v2044, 1
    %v2054 = vrot.slane %v2044, 2
    %v2063 = vadd.f32 %v168, %v2048
    %v2064 = vadd.f32 %v173, %v2049
    %v2065 = vadd.f32 %v178, %v2050
    %v2066 = vadd.f32 %v183, %v2051
    %v2067 = vadd.f32 %v188, %v2052
    %v2068 = vadd.f32 %v193, %v2044
    %v2069 = vadd.f32 %v198, %v2053
    %v2070 = vadd.f32 %v203, %v2054
    %v2071 = vxor.u32 %v2063, 2147483648
    %v2072 = vxor.u32 %v2064, 2147483648
    %v2073 = vxor.u32 %v2065, 2147483648
    %v2074 = vxor.u32 %v2066, 2147483648
    %v2075 = vxor.u32 %v2067, 2147483648
    %v2076 = vxor.u32 %v2068, 2147483648
    %v2077 = vxor.u32 %v2069, 2147483648
    %v2078 = vxor.u32 %v2070, 2147483648
    %v2079 = vmul.f32 %v2071, 1.442695
    %v2080 = vpow.pop %v2079
    %v2081 = vmul.f32 %v2072, 1.442695
    %v2082 = vpow.pop %v2081
    %v2083 = vmul.f32 %v2073, 1.442695
    %v2084 = vpow.pop %v2083
    %v2085 = vmul.f32 %v2074, 1.442695
    %v2086 = vpow.pop %v2085
    %v2087 = vmul.f32 %v2075, 1.442695
    %v2088 = vpow.pop %v2087
    %v2089 = vmul.f32 %v2076, 1.442695
    %v2090 = vpow.pop %v2089
    %v2091 = vmul.f32 %v2077, 1.442695
    %v2092 = vpow.pop %v2091
    %v2093 = vmul.f32 %v2078, 1.442695
    %v2094 = vpow.pop %v2093
    %v2095 = vadd.f32 %v2080, 1.0
    %v2096 = vadd.f32 %v2082, 1.0
    %v2097 = vadd.f32 %v2084, 1.0
    %v2098 = vadd.f32 %v2086, 1.0
    %v2099 = vadd.f32 %v2088, 1.0
    %v2100 = vadd.f32 %v2090, 1.0
    %v2101 = vadd.f32 %v2092, 1.0
    %v2102 = vadd.f32 %v2094, 1.0
    %v2103 = vrcp.pop %v2095
    %v2104 = vmul.f32 1.0, %v2103
    %v2105 = vrcp.pop %v2096
    %v2106 = vmul.f32 1.0, %v2105
    %v2107 = vrcp.pop %v2097
    %v2108 = vmul.f32 1.0, %v2107
    %v2109 = vrcp.pop %v2098
    %v2110 = vmul.f32 1.0, %v2109
    %v2111 = vrcp.pop %v2099
    %v2112 = vmul.f32 1.0, %v2111
    %v2113 = vrcp.pop %v2100
    %v2114 = vmul.f32 1.0, %v2113
    %v2115 = vrcp.pop %v2101
    %v2116 = vmul.f32 1.0, %v2115
    %v2117 = vrcp.pop %v2102
    %v2118 = vmul.f32 1.0, %v2117
    %v2119 = vtanh.pop %v2063
    %v2120 = vtanh.pop %v2064
    %v2121 = vtanh.pop %v2065
    %v2122 = vtanh.pop %v2066
    %v2123 = vtanh.pop %v2067
    %v2124 = vtanh.pop %v2068
    %v2125 = vtanh.pop %v2069
    %v2126 = vtanh.pop %v2070
    %v2135 = vrot.slane %v1872, 7
    %v2136 = vrot.slane %v1873, 7
    %v2137 = vrot.slane %v1874, 7
    %v2138 = vrot.slane %v1875, 7
    %v2139 = vrot.slane %v1876, 7
    %v2140 = vrot.slane %v1877, 7
    %v2141 = vrot.slane %v1878, 7
    %v2142 = vrot.slane %v1879, 7
    %v2151 = vmul.f32 %v2104, %v2135
    %v2152 = vmul.f32 %v2106, %v2136
    %v2153 = vmul.f32 %v2108, %v2137
    %v2154 = vmul.f32 %v2110, %v2138
    %v2155 = vmul.f32 %v2112, %v2139
    %v2156 = vmul.f32 %v2114, %v2140
    %v2157 = vmul.f32 %v2116, %v2141
    %v2158 = vmul.f32 %v2118, %v2142
    %2167 = vrot.lane.b32.xlu0 %v2119, 64
    %v2168 = vpop.permute.xlu0 %2167
    %2169 = vrot.lane.b32.xlu0 %v2120, 64
    %v2170 = vpop.permute.xlu0 %2169
    %2171 = vrot.lane.b32.xlu0 %v2121, 64
    %v2172 = vpop.permute.xlu0 %2171
    %2173 = vrot.lane.b32.xlu0 %v2122, 64
    %v2174 = vpop.permute.xlu0 %2173
    %2175 = vrot.lane.b32.xlu0 %v2123, 64
    %v2176 = vpop.permute.xlu0 %2175
    %2177 = vrot.lane.b32.xlu0 %v2124, 64
    %v2178 = vpop.permute.xlu0 %2177
    %2179 = vrot.lane.b32.xlu0 %v2125, 64
    %v2180 = vpop.permute.xlu0 %2179
    %2181 = vrot.lane.b32.xlu0 %v2126, 64
    %v2182 = vpop.permute.xlu0 %2181
    %v2191 = vmul.f32 %v2104, %v2168
    %v2192 = vmul.f32 %v2106, %v2170
    %v2193 = vmul.f32 %v2108, %v2172
    %v2194 = vmul.f32 %v2110, %v2174
    %v2195 = vmul.f32 %v2112, %v2176
    %v2196 = vmul.f32 %v2114, %v2178
    %v2197 = vmul.f32 %v2116, %v2180
    %v2198 = vmul.f32 %v2118, %v2182
    %2207 = vrot.lane.b32.xlu0 %v2191, 32
    %v2208 = vpop.permute.xlu0 %2207
    %2209 = vrot.lane.b32.xlu0 %v2192, 32
    %v2210 = vpop.permute.xlu0 %2209
    %2211 = vrot.lane.b32.xlu0 %v2193, 32
    %v2212 = vpop.permute.xlu0 %2211
    %2213 = vrot.lane.b32.xlu0 %v2194, 32
    %v2214 = vpop.permute.xlu0 %2213
    %2215 = vrot.lane.b32.xlu0 %v2195, 32
    %v2216 = vpop.permute.xlu0 %2215
    %2217 = vrot.lane.b32.xlu0 %v2196, 32
    %v2218 = vpop.permute.xlu0 %2217
    %2219 = vrot.lane.b32.xlu0 %v2197, 32
    %v2220 = vpop.permute.xlu0 %2219
    %2221 = vrot.lane.b32.xlu0 %v2198, 32
    %v2222 = vpop.permute.xlu0 %2221
    %v2231 = vadd.f32 %v2151, %v2208
    %v2232 = vadd.f32 %v2152, %v2210
    %v2233 = vadd.f32 %v2153, %v2212
    %v2234 = vadd.f32 %v2154, %v2214
    %v2235 = vadd.f32 %v2155, %v2216
    %v2236 = vadd.f32 %v2156, %v2218
    %v2237 = vadd.f32 %v2157, %v2220
    %v2238 = vadd.f32 %v2158, %v2222
    %v2239 = vtanh.pop %v2231
    %v2240 = vtanh.pop %v2232
    %v2241 = vtanh.pop %v2233
    %v2242 = vtanh.pop %v2234
    %v2243 = vtanh.pop %v2235
    %v2244 = vtanh.pop %v2236
    %v2245 = vtanh.pop %v2237
    %v2246 = vtanh.pop %v2238
    %2255 = vrot.lane.b32.xlu0 %v2239, 64
    %v2256 = vpop.permute.xlu0 %2255
    %2257 = vrot.lane.b32.xlu0 %v2240, 64
    %v2258 = vpop.permute.xlu0 %2257
    %2259 = vrot.lane.b32.xlu0 %v2241, 64
    %v2260 = vpop.permute.xlu0 %2259
    %2261 = vrot.lane.b32.xlu0 %v2242, 64
    %v2262 = vpop.permute.xlu0 %2261
    %2263 = vrot.lane.b32.xlu0 %v2243, 64
    %v2264 = vpop.permute.xlu0 %2263
    %2265 = vrot.lane.b32.xlu0 %v2244, 64
    %v2266 = vpop.permute.xlu0 %2265
    %2267 = vrot.lane.b32.xlu0 %v2245, 64
    %v2268 = vpop.permute.xlu0 %2267
    %2269 = vrot.lane.b32.xlu0 %v2246, 64
    %v2270 = vpop.permute.xlu0 %2269
    %v2279 = vmul.f32 %v2104, %v2256
    %v2280 = vmul.f32 %v2106, %v2258
    %v2281 = vmul.f32 %v2108, %v2260
    %v2282 = vmul.f32 %v2110, %v2262
    %v2283 = vmul.f32 %v2112, %v2264
    %v2284 = vmul.f32 %v2114, %v2266
    %v2285 = vmul.f32 %v2116, %v2268
    %v2286 = vmul.f32 %v2118, %v2270
    %v2295 = vrot.slane %v2279, 5
    %v2296 = vrot.slane %v2280, 5
    %v2297 = vrot.slane %v2281, 5
    %v2298 = vrot.slane %v2282, 5
    %v2299 = vrot.slane %v2283, 5
    %v2300 = vrot.slane %v2284, 5
    %v2301 = vrot.slane %v2285, 5
    %v2302 = vrot.slane %v2286, 5
    %v2311 = vadd.f32 %v1952, %v2295
    %v2312 = vadd.f32 %v1953, %v2296
    %v2313 = vadd.f32 %v1954, %v2297
    %v2314 = vadd.f32 %v1955, %v2298
    %v2315 = vadd.f32 %v1956, %v2299
    %v2316 = vadd.f32 %v1957, %v2300
    %v2317 = vadd.f32 %v1958, %v2301
    %v2318 = vadd.f32 %v1959, %v2302
    %v2319 = vrot.slane %v2280, 4
    %v2320 = vsel %vm517, %v2319, %v2295
    %v2321 = vrot.slane %v2281, 3
    %v2322 = vsel %vm520, %v2321, %v2320
    %v2323 = vrot.slane %v2282, 2
    %v2324 = vsel %vm523, %v2323, %v2322
    %v2325 = vrot.slane %v2283, 1
    %v2326 = vsel %vm526, %v2325, %v2324
    %v2327 = vsel %vm529, %v2284, %v2326
    %v2328 = vrot.slane %v2285, 7
    %v2329 = vsel %vm532, %v2328, %v2327
    %v2330 = vrot.slane %v2286, 6
    %v2331 = vsel %vm535, %v2330, %v2329
    %2332 = vrot.lane.b32.xlu0 %v2331, 32
    %v2333 = vpop.permute.xlu0 %2332
    %v2334 = vsel %vm210, %v2333, 0
    %2336 = vmatprep.subr.mxu0 0.0
    %2337 = vmatpush1.msra.mxu0 0.0
    %2338 = vmatprep.subr.mxu0 0.0
    %2339 = vmatpush1.msra.mxu0 0.0
    %2340 = vmatprep.subr.mxu0 0.0
    %2341 = vmatpush1.msra.mxu0 0.0
    %2342 = vmatprep.subr.mxu0 0.0
    %2343 = vmatpush1.msra.mxu0 0.0
    %2344 = vmatprep.subr.mxu0 0.0
    %2345 = vmatpush1.msra.mxu0 0.0
    %2346 = vmatprep.subr.mxu0 0.0
    %2347 = vmatpush1.msra.mxu0 0.0
    %2348 = vmatprep.subr.mxu0 0.0
    %2349 = vmatpush1.msra.mxu0 0.0
    %2350 = vmatprep.subr.mxu0 0.0
    %2351 = vmatpush1.msra.mxu0 0.0
    %2352 = vmatprep.subr.mxu0 0.0
    %2353 = vmatpush1.msra.mxu0 0.0
    %2354 = vmatprep.subr.mxu0 0.0
    %2355 = vmatpush1.msra.mxu0 0.0
    %2356 = vmatprep.subr.mxu0 0.0
    %2357 = vmatpush1.msra.mxu0 0.0
    %2358 = vmatprep.subr.mxu0 0.0
    %2359 = vmatpush1.msra.mxu0 0.0
    %2360 = vmatprep.subr.mxu0 0.0
    %2361 = vmatpush1.msra.mxu0 %v209
    %2362 = vmatprep.subr.mxu0 0.0
    %2363 = vmatpush1.msra.mxu0 %v208
    %2364 = vmatprep.subr.mxu0 0.0
    %2365 = vmatpush1.msra.mxu0 %v207
    %2366 = vmatprep.subr.mxu0 0.0
    %2367 = vmatpush1.msra.mxu0 %v206
    %2368 = vmatprep.subr.mxu0 0.0
    %2369 = vmatpush2.msra.mxu0 0.0
    %2370 = vmatprep.subr.mxu0 0.0
    %2371 = vmatpush2.msra.mxu0 0.0
    %2372 = vmatprep.subr.mxu0 0.0
    %2373 = vmatpush2.msra.mxu0 0.0
    %2374 = vmatprep.subr.mxu0 0.0
    %2375 = vmatpush2.msra.mxu0 0.0
    %2376 = vmatprep.subr.mxu0 0.0
    %2377 = vmatpush2.msra.mxu0 0.0
    %2378 = vmatprep.subr.mxu0 0.0
    %2379 = vmatpush2.msra.mxu0 0.0
    %2380 = vmatprep.subr.mxu0 0.0
    %2381 = vmatpush2.msra.mxu0 0.0
    %2382 = vmatprep.subr.mxu0 0.0
    %2383 = vmatpush2.msra.mxu0 0.0
    %2384 = vmatprep.subr.mxu0 0.0
    %2385 = vmatpush2.msra.mxu0 0.0
    %2386 = vmatprep.subr.mxu0 0.0
    %2387 = vmatpush2.msra.mxu0 0.0
    %2388 = vmatprep.subr.mxu0 0.0
    %2389 = vmatpush2.msra.mxu0 0.0
    %2390 = vmatprep.subr.mxu0 0.0
    %2391 = vmatpush2.msra.mxu0 0.0
    %2392 = vmatprep.subr.mxu0 0.0
    %2393 = vmatpush2.msra.mxu0 0.0
    %2394 = vmatprep.subr.mxu0 0.0
    %2395 = vmatpush2.msra.mxu0 0.0
    %2396 = vmatprep.subr.mxu0 0.0
    %2397 = vmatpush2.msra.mxu0 0.0
    %2398 = vmatprep.subr.mxu0 0.0
    %2399 = vmatpush2.msra.mxu0 0.0
    %2400 = vmatprep.mubr.f32.mxu0 0.0
    %2401 = vmatmul.mubr.f32.gmra.mxu0 %v2334
    %v2402 = vpop.f32.mrf.mxu0
    %v2403 = vadd.f32 0.0, %v2402
    %v2404 = vpop.f32.mrf.mxu0
    %2405 = vdwg.mxu0
    %v2407 = vrot.slane %v2403, 2
    %v2408 = vrot.slane %v2403, 3
    %v2409 = vrot.slane %v2403, 4
    %v2410 = vrot.slane %v2403, 5
    %v2411 = vrot.slane %v2403, 6
    %v2412 = vrot.slane %v2403, 7
    %v2413 = vrot.slane %v2403, 1
    %v2422 = vadd.f32 %v168, %v2407
    %v2423 = vadd.f32 %v173, %v2408
    %v2424 = vadd.f32 %v178, %v2409
    %v2425 = vadd.f32 %v183, %v2410
    %v2426 = vadd.f32 %v188, %v2411
    %v2427 = vadd.f32 %v193, %v2412
    %v2428 = vadd.f32 %v198, %v2403
    %v2429 = vadd.f32 %v203, %v2413
    %v2430 = vxor.u32 %v2422, 2147483648
    %v2431 = vxor.u32 %v2423, 2147483648
    %v2432 = vxor.u32 %v2424, 2147483648
    %v2433 = vxor.u32 %v2425, 2147483648
    %v2434 = vxor.u32 %v2426, 2147483648
    %v2435 = vxor.u32 %v2427, 2147483648
    %v2436 = vxor.u32 %v2428, 2147483648
    %v2437 = vxor.u32 %v2429, 2147483648
    %v2438 = vmul.f32 %v2430, 1.442695
    %v2439 = vpow.pop %v2438
    %v2440 = vmul.f32 %v2431, 1.442695
    %v2441 = vpow.pop %v2440
    %v2442 = vmul.f32 %v2432, 1.442695
    %v2443 = vpow.pop %v2442
    %v2444 = vmul.f32 %v2433, 1.442695
    %v2445 = vpow.pop %v2444
    %v2446 = vmul.f32 %v2434, 1.442695
    %v2447 = vpow.pop %v2446
    %v2448 = vmul.f32 %v2435, 1.442695
    %v2449 = vpow.pop %v2448
    %v2450 = vmul.f32 %v2436, 1.442695
    %v2451 = vpow.pop %v2450
    %v2452 = vmul.f32 %v2437, 1.442695
    %v2453 = vpow.pop %v2452
    %v2454 = vadd.f32 %v2439, 1.0
    %v2455 = vadd.f32 %v2441, 1.0
    %v2456 = vadd.f32 %v2443, 1.0
    %v2457 = vadd.f32 %v2445, 1.0
    %v2458 = vadd.f32 %v2447, 1.0
    %v2459 = vadd.f32 %v2449, 1.0
    %v2460 = vadd.f32 %v2451, 1.0
    %v2461 = vadd.f32 %v2453, 1.0
    %v2462 = vrcp.pop %v2454
    %v2463 = vmul.f32 1.0, %v2462
    %v2464 = vrcp.pop %v2455
    %v2465 = vmul.f32 1.0, %v2464
    %v2466 = vrcp.pop %v2456
    %v2467 = vmul.f32 1.0, %v2466
    %v2468 = vrcp.pop %v2457
    %v2469 = vmul.f32 1.0, %v2468
    %v2470 = vrcp.pop %v2458
    %v2471 = vmul.f32 1.0, %v2470
    %v2472 = vrcp.pop %v2459
    %v2473 = vmul.f32 1.0, %v2472
    %v2474 = vrcp.pop %v2460
    %v2475 = vmul.f32 1.0, %v2474
    %v2476 = vrcp.pop %v2461
    %v2477 = vmul.f32 1.0, %v2476
    %v2478 = vtanh.pop %v2422
    %v2479 = vtanh.pop %v2423
    %v2480 = vtanh.pop %v2424
    %v2481 = vtanh.pop %v2425
    %v2482 = vtanh.pop %v2426
    %v2483 = vtanh.pop %v2427
    %v2484 = vtanh.pop %v2428
    %v2485 = vtanh.pop %v2429
    %v2494 = vrot.slane %v2231, 7
    %v2495 = vrot.slane %v2232, 7
    %v2496 = vrot.slane %v2233, 7
    %v2497 = vrot.slane %v2234, 7
    %v2498 = vrot.slane %v2235, 7
    %v2499 = vrot.slane %v2236, 7
    %v2500 = vrot.slane %v2237, 7
    %v2501 = vrot.slane %v2238, 7
    %v2510 = vmul.f32 %v2463, %v2494
    %v2511 = vmul.f32 %v2465, %v2495
    %v2512 = vmul.f32 %v2467, %v2496
    %v2513 = vmul.f32 %v2469, %v2497
    %v2514 = vmul.f32 %v2471, %v2498
    %v2515 = vmul.f32 %v2473, %v2499
    %v2516 = vmul.f32 %v2475, %v2500
    %v2517 = vmul.f32 %v2477, %v2501
    %2526 = vrot.lane.b32.xlu0 %v2478, 64
    %v2527 = vpop.permute.xlu0 %2526
    %2528 = vrot.lane.b32.xlu0 %v2479, 64
    %v2529 = vpop.permute.xlu0 %2528
    %2530 = vrot.lane.b32.xlu0 %v2480, 64
    %v2531 = vpop.permute.xlu0 %2530
    %2532 = vrot.lane.b32.xlu0 %v2481, 64
    %v2533 = vpop.permute.xlu0 %2532
    %2534 = vrot.lane.b32.xlu0 %v2482, 64
    %v2535 = vpop.permute.xlu0 %2534
    %2536 = vrot.lane.b32.xlu0 %v2483, 64
    %v2537 = vpop.permute.xlu0 %2536
    %2538 = vrot.lane.b32.xlu0 %v2484, 64
    %v2539 = vpop.permute.xlu0 %2538
    %2540 = vrot.lane.b32.xlu0 %v2485, 64
    %v2541 = vpop.permute.xlu0 %2540
    %v2550 = vmul.f32 %v2463, %v2527
    %v2551 = vmul.f32 %v2465, %v2529
    %v2552 = vmul.f32 %v2467, %v2531
    %v2553 = vmul.f32 %v2469, %v2533
    %v2554 = vmul.f32 %v2471, %v2535
    %v2555 = vmul.f32 %v2473, %v2537
    %v2556 = vmul.f32 %v2475, %v2539
    %v2557 = vmul.f32 %v2477, %v2541
    %2566 = vrot.lane.b32.xlu0 %v2550, 32
    %v2567 = vpop.permute.xlu0 %2566
    %2568 = vrot.lane.b32.xlu0 %v2551, 32
    %v2569 = vpop.permute.xlu0 %2568
    %2570 = vrot.lane.b32.xlu0 %v2552, 32
    %v2571 = vpop.permute.xlu0 %2570
    %2572 = vrot.lane.b32.xlu0 %v2553, 32
    %v2573 = vpop.permute.xlu0 %2572
    %2574 = vrot.lane.b32.xlu0 %v2554, 32
    %v2575 = vpop.permute.xlu0 %2574
    %2576 = vrot.lane.b32.xlu0 %v2555, 32
    %v2577 = vpop.permute.xlu0 %2576
    %2578 = vrot.lane.b32.xlu0 %v2556, 32
    %v2579 = vpop.permute.xlu0 %2578
    %2580 = vrot.lane.b32.xlu0 %v2557, 32
    %v2581 = vpop.permute.xlu0 %2580
    %v2590 = vadd.f32 %v2510, %v2567
    %v2591 = vadd.f32 %v2511, %v2569
    %v2592 = vadd.f32 %v2512, %v2571
    %v2593 = vadd.f32 %v2513, %v2573
    %v2594 = vadd.f32 %v2514, %v2575
    %v2595 = vadd.f32 %v2515, %v2577
    %v2596 = vadd.f32 %v2516, %v2579
    %v2597 = vadd.f32 %v2517, %v2581
    %v2598 = vtanh.pop %v2590
    %v2599 = vtanh.pop %v2591
    %v2600 = vtanh.pop %v2592
    %v2601 = vtanh.pop %v2593
    %v2602 = vtanh.pop %v2594
    %v2603 = vtanh.pop %v2595
    %v2604 = vtanh.pop %v2596
    %v2605 = vtanh.pop %v2597
    %2614 = vrot.lane.b32.xlu0 %v2598, 64
    %v2615 = vpop.permute.xlu0 %2614
    %2616 = vrot.lane.b32.xlu0 %v2599, 64
    %v2617 = vpop.permute.xlu0 %2616
    %2618 = vrot.lane.b32.xlu0 %v2600, 64
    %v2619 = vpop.permute.xlu0 %2618
    %2620 = vrot.lane.b32.xlu0 %v2601, 64
    %v2621 = vpop.permute.xlu0 %2620
    %2622 = vrot.lane.b32.xlu0 %v2602, 64
    %v2623 = vpop.permute.xlu0 %2622
    %2624 = vrot.lane.b32.xlu0 %v2603, 64
    %v2625 = vpop.permute.xlu0 %2624
    %2626 = vrot.lane.b32.xlu0 %v2604, 64
    %v2627 = vpop.permute.xlu0 %2626
    %2628 = vrot.lane.b32.xlu0 %v2605, 64
    %v2629 = vpop.permute.xlu0 %2628
    %v2638 = vmul.f32 %v2463, %v2615
    %v2639 = vmul.f32 %v2465, %v2617
    %v2640 = vmul.f32 %v2467, %v2619
    %v2641 = vmul.f32 %v2469, %v2621
    %v2642 = vmul.f32 %v2471, %v2623
    %v2643 = vmul.f32 %v2473, %v2625
    %v2644 = vmul.f32 %v2475, %v2627
    %v2645 = vmul.f32 %v2477, %v2629
    %v2654 = vrot.slane %v2638, 6
    %v2655 = vrot.slane %v2639, 6
    %v2656 = vrot.slane %v2640, 6
    %v2657 = vrot.slane %v2641, 6
    %v2658 = vrot.slane %v2642, 6
    %v2659 = vrot.slane %v2643, 6
    %v2660 = vrot.slane %v2644, 6
    %v2661 = vrot.slane %v2645, 6
    %v2670 = vadd.f32 %v2311, %v2654
    %v2671 = vadd.f32 %v2312, %v2655
    %v2672 = vadd.f32 %v2313, %v2656
    %v2673 = vadd.f32 %v2314, %v2657
    %v2674 = vadd.f32 %v2315, %v2658
    %v2675 = vadd.f32 %v2316, %v2659
    %v2676 = vadd.f32 %v2317, %v2660
    %v2677 = vadd.f32 %v2318, %v2661
    %v2678 = vrot.slane %v2639, 5
    %v2679 = vsel %vm517, %v2678, %v2654
    %v2680 = vrot.slane %v2640, 4
    %v2681 = vsel %vm520, %v2680, %v2679
    %v2682 = vrot.slane %v2641, 3
    %v2683 = vsel %vm523, %v2682, %v2681
    %v2684 = vrot.slane %v2642, 2
    %v2685 = vsel %vm526, %v2684, %v2683
    %v2686 = vrot.slane %v2643, 1
    %v2687 = vsel %vm529, %v2686, %v2685
    %v2688 = vsel %vm532, %v2644, %v2687
    %v2689 = vrot.slane %v2645, 7
    %v2690 = vsel %vm535, %v2689, %v2688
    %2691 = vrot.lane.b32.xlu0 %v2690, 32
    %v2692 = vpop.permute.xlu0 %2691
    %v2693 = vsel %vm210, %v2692, 0
    %2695 = vmatprep.subr.mxu0 0.0
    %2696 = vmatpush1.msra.mxu0 0.0
    %2697 = vmatprep.subr.mxu0 0.0
    %2698 = vmatpush1.msra.mxu0 0.0
    %2699 = vmatprep.subr.mxu0 0.0
    %2700 = vmatpush1.msra.mxu0 0.0
    %2701 = vmatprep.subr.mxu0 0.0
    %2702 = vmatpush1.msra.mxu0 0.0
    %2703 = vmatprep.subr.mxu0 0.0
    %2704 = vmatpush1.msra.mxu0 0.0
    %2705 = vmatprep.subr.mxu0 0.0
    %2706 = vmatpush1.msra.mxu0 0.0
    %2707 = vmatprep.subr.mxu0 0.0
    %2708 = vmatpush1.msra.mxu0 0.0
    %2709 = vmatprep.subr.mxu0 0.0
    %2710 = vmatpush1.msra.mxu0 0.0
    %2711 = vmatprep.subr.mxu0 0.0
    %2712 = vmatpush1.msra.mxu0 0.0
    %2713 = vmatprep.subr.mxu0 0.0
    %2714 = vmatpush1.msra.mxu0 0.0
    %2715 = vmatprep.subr.mxu0 0.0
    %2716 = vmatpush1.msra.mxu0 0.0
    %2717 = vmatprep.subr.mxu0 0.0
    %2718 = vmatpush1.msra.mxu0 0.0
    %2719 = vmatprep.subr.mxu0 0.0
    %2720 = vmatpush1.msra.mxu0 %v209
    %2721 = vmatprep.subr.mxu0 0.0
    %2722 = vmatpush1.msra.mxu0 %v208
    %2723 = vmatprep.subr.mxu0 0.0
    %2724 = vmatpush1.msra.mxu0 %v207
    %2725 = vmatprep.subr.mxu0 0.0
    %2726 = vmatpush1.msra.mxu0 %v206
    %2727 = vmatprep.subr.mxu0 0.0
    %2728 = vmatpush2.msra.mxu0 0.0
    %2729 = vmatprep.subr.mxu0 0.0
    %2730 = vmatpush2.msra.mxu0 0.0
    %2731 = vmatprep.subr.mxu0 0.0
    %2732 = vmatpush2.msra.mxu0 0.0
    %2733 = vmatprep.subr.mxu0 0.0
    %2734 = vmatpush2.msra.mxu0 0.0
    %2735 = vmatprep.subr.mxu0 0.0
    %2736 = vmatpush2.msra.mxu0 0.0
    %2737 = vmatprep.subr.mxu0 0.0
    %2738 = vmatpush2.msra.mxu0 0.0
    %2739 = vmatprep.subr.mxu0 0.0
    %2740 = vmatpush2.msra.mxu0 0.0
    %2741 = vmatprep.subr.mxu0 0.0
    %2742 = vmatpush2.msra.mxu0 0.0
    %2743 = vmatprep.subr.mxu0 0.0
    %2744 = vmatpush2.msra.mxu0 0.0
    %2745 = vmatprep.subr.mxu0 0.0
    %2746 = vmatpush2.msra.mxu0 0.0
    %2747 = vmatprep.subr.mxu0 0.0
    %2748 = vmatpush2.msra.mxu0 0.0
    %2749 = vmatprep.subr.mxu0 0.0
    %2750 = vmatpush2.msra.mxu0 0.0
    %2751 = vmatprep.subr.mxu0 0.0
    %2752 = vmatpush2.msra.mxu0 0.0
    %2753 = vmatprep.subr.mxu0 0.0
    %2754 = vmatpush2.msra.mxu0 0.0
    %2755 = vmatprep.subr.mxu0 0.0
    %2756 = vmatpush2.msra.mxu0 0.0
    %2757 = vmatprep.subr.mxu0 0.0
    %2758 = vmatpush2.msra.mxu0 0.0
    %2759 = vmatprep.mubr.f32.mxu0 0.0
    %2760 = vmatmul.mubr.f32.gmra.mxu0 %v2693
    %v2761 = vpop.f32.mrf.mxu0
    %v2762 = vadd.f32 0.0, %v2761
    %v2763 = vpop.f32.mrf.mxu0
    %2764 = vdwg.mxu0
    %v2766 = vrot.slane %v2762, 1
    %v2767 = vrot.slane %v2762, 2
    %v2768 = vrot.slane %v2762, 3
    %v2769 = vrot.slane %v2762, 4
    %v2770 = vrot.slane %v2762, 5
    %v2771 = vrot.slane %v2762, 6
    %v2772 = vrot.slane %v2762, 7
    %v2781 = vadd.f32 %v168, %v2766
    %v2782 = vadd.f32 %v173, %v2767
    %v2783 = vadd.f32 %v178, %v2768
    %v2784 = vadd.f32 %v183, %v2769
    %v2785 = vadd.f32 %v188, %v2770
    %v2786 = vadd.f32 %v193, %v2771
    %v2787 = vadd.f32 %v198, %v2772
    %v2788 = vadd.f32 %v203, %v2762
    %v2789 = vxor.u32 %v2781, 2147483648
    %v2790 = vxor.u32 %v2782, 2147483648
    %v2791 = vxor.u32 %v2783, 2147483648
    %v2792 = vxor.u32 %v2784, 2147483648
    %v2793 = vxor.u32 %v2785, 2147483648
    %v2794 = vxor.u32 %v2786, 2147483648
    %v2795 = vxor.u32 %v2787, 2147483648
    %v2796 = vxor.u32 %v2788, 2147483648
    %v2797 = vmul.f32 %v2789, 1.442695
    %v2798 = vpow.pop %v2797
    %v2799 = vmul.f32 %v2790, 1.442695
    %v2800 = vpow.pop %v2799
    %v2801 = vmul.f32 %v2791, 1.442695
    %v2802 = vpow.pop %v2801
    %v2803 = vmul.f32 %v2792, 1.442695
    %v2804 = vpow.pop %v2803
    %v2805 = vmul.f32 %v2793, 1.442695
    %v2806 = vpow.pop %v2805
    %v2807 = vmul.f32 %v2794, 1.442695
    %v2808 = vpow.pop %v2807
    %v2809 = vmul.f32 %v2795, 1.442695
    %v2810 = vpow.pop %v2809
    %v2811 = vmul.f32 %v2796, 1.442695
    %v2812 = vpow.pop %v2811
    %v2813 = vadd.f32 %v2798, 1.0
    %v2814 = vadd.f32 %v2800, 1.0
    %v2815 = vadd.f32 %v2802, 1.0
    %v2816 = vadd.f32 %v2804, 1.0
    %v2817 = vadd.f32 %v2806, 1.0
    %v2818 = vadd.f32 %v2808, 1.0
    %v2819 = vadd.f32 %v2810, 1.0
    %v2820 = vadd.f32 %v2812, 1.0
    %v2821 = vrcp.pop %v2813
    %v2822 = vmul.f32 1.0, %v2821
    %v2823 = vrcp.pop %v2814
    %v2824 = vmul.f32 1.0, %v2823
    %v2825 = vrcp.pop %v2815
    %v2826 = vmul.f32 1.0, %v2825
    %v2827 = vrcp.pop %v2816
    %v2828 = vmul.f32 1.0, %v2827
    %v2829 = vrcp.pop %v2817
    %v2830 = vmul.f32 1.0, %v2829
    %v2831 = vrcp.pop %v2818
    %v2832 = vmul.f32 1.0, %v2831
    %v2833 = vrcp.pop %v2819
    %v2834 = vmul.f32 1.0, %v2833
    %v2835 = vrcp.pop %v2820
    %v2836 = vmul.f32 1.0, %v2835
    %v2837 = vtanh.pop %v2781
    %v2838 = vtanh.pop %v2782
    %v2839 = vtanh.pop %v2783
    %v2840 = vtanh.pop %v2784
    %v2841 = vtanh.pop %v2785
    %v2842 = vtanh.pop %v2786
    %v2843 = vtanh.pop %v2787
    %v2844 = vtanh.pop %v2788
    %v2853 = vrot.slane %v2590, 7
    %v2854 = vrot.slane %v2591, 7
    %v2855 = vrot.slane %v2592, 7
    %v2856 = vrot.slane %v2593, 7
    %v2857 = vrot.slane %v2594, 7
    %v2858 = vrot.slane %v2595, 7
    %v2859 = vrot.slane %v2596, 7
    %v2860 = vrot.slane %v2597, 7
    %v2869 = vmul.f32 %v2822, %v2853
    %v2870 = vmul.f32 %v2824, %v2854
    %v2871 = vmul.f32 %v2826, %v2855
    %v2872 = vmul.f32 %v2828, %v2856
    %v2873 = vmul.f32 %v2830, %v2857
    %v2874 = vmul.f32 %v2832, %v2858
    %v2875 = vmul.f32 %v2834, %v2859
    %v2876 = vmul.f32 %v2836, %v2860
    %2885 = vrot.lane.b32.xlu0 %v2837, 64
    %v2886 = vpop.permute.xlu0 %2885
    %2887 = vrot.lane.b32.xlu0 %v2838, 64
    %v2888 = vpop.permute.xlu0 %2887
    %2889 = vrot.lane.b32.xlu0 %v2839, 64
    %v2890 = vpop.permute.xlu0 %2889
    %2891 = vrot.lane.b32.xlu0 %v2840, 64
    %v2892 = vpop.permute.xlu0 %2891
    %2893 = vrot.lane.b32.xlu0 %v2841, 64
    %v2894 = vpop.permute.xlu0 %2893
    %2895 = vrot.lane.b32.xlu0 %v2842, 64
    %v2896 = vpop.permute.xlu0 %2895
    %2897 = vrot.lane.b32.xlu0 %v2843, 64
    %v2898 = vpop.permute.xlu0 %2897
    %2899 = vrot.lane.b32.xlu0 %v2844, 64
    %v2900 = vpop.permute.xlu0 %2899
    %v2909 = vmul.f32 %v2822, %v2886
    %v2910 = vmul.f32 %v2824, %v2888
    %v2911 = vmul.f32 %v2826, %v2890
    %v2912 = vmul.f32 %v2828, %v2892
    %v2913 = vmul.f32 %v2830, %v2894
    %v2914 = vmul.f32 %v2832, %v2896
    %v2915 = vmul.f32 %v2834, %v2898
    %v2916 = vmul.f32 %v2836, %v2900
    %2925 = vrot.lane.b32.xlu0 %v2909, 32
    %v2926 = vpop.permute.xlu0 %2925
    %2927 = vrot.lane.b32.xlu0 %v2910, 32
    %v2928 = vpop.permute.xlu0 %2927
    %2929 = vrot.lane.b32.xlu0 %v2911, 32
    %v2930 = vpop.permute.xlu0 %2929
    %2931 = vrot.lane.b32.xlu0 %v2912, 32
    %v2932 = vpop.permute.xlu0 %2931
    %2933 = vrot.lane.b32.xlu0 %v2913, 32
    %v2934 = vpop.permute.xlu0 %2933
    %2935 = vrot.lane.b32.xlu0 %v2914, 32
    %v2936 = vpop.permute.xlu0 %2935
    %2937 = vrot.lane.b32.xlu0 %v2915, 32
    %v2938 = vpop.permute.xlu0 %2937
    %2939 = vrot.lane.b32.xlu0 %v2916, 32
    %v2940 = vpop.permute.xlu0 %2939
    %v2949 = vadd.f32 %v2869, %v2926
    %v2950 = vadd.f32 %v2870, %v2928
    %v2951 = vadd.f32 %v2871, %v2930
    %v2952 = vadd.f32 %v2872, %v2932
    %v2953 = vadd.f32 %v2873, %v2934
    %v2954 = vadd.f32 %v2874, %v2936
    %v2955 = vadd.f32 %v2875, %v2938
    %v2956 = vadd.f32 %v2876, %v2940
    %v2957 = vtanh.pop %v2949
    %v2958 = vtanh.pop %v2950
    %v2959 = vtanh.pop %v2951
    %v2960 = vtanh.pop %v2952
    %v2961 = vtanh.pop %v2953
    %v2962 = vtanh.pop %v2954
    %v2963 = vtanh.pop %v2955
    %v2964 = vtanh.pop %v2956
    %2973 = vrot.lane.b32.xlu0 %v2957, 64
    %v2974 = vpop.permute.xlu0 %2973
    %2975 = vrot.lane.b32.xlu0 %v2958, 64
    %v2976 = vpop.permute.xlu0 %2975
    %2977 = vrot.lane.b32.xlu0 %v2959, 64
    %v2978 = vpop.permute.xlu0 %2977
    %2979 = vrot.lane.b32.xlu0 %v2960, 64
    %v2980 = vpop.permute.xlu0 %2979
    %2981 = vrot.lane.b32.xlu0 %v2961, 64
    %v2982 = vpop.permute.xlu0 %2981
    %2983 = vrot.lane.b32.xlu0 %v2962, 64
    %v2984 = vpop.permute.xlu0 %2983
    %2985 = vrot.lane.b32.xlu0 %v2963, 64
    %v2986 = vpop.permute.xlu0 %2985
    %2987 = vrot.lane.b32.xlu0 %v2964, 64
    %v2988 = vpop.permute.xlu0 %2987
    %v2997 = vmul.f32 %v2822, %v2974
    %v2998 = vmul.f32 %v2824, %v2976
    %v2999 = vmul.f32 %v2826, %v2978
    %v3000 = vmul.f32 %v2828, %v2980
    %v3001 = vmul.f32 %v2830, %v2982
    %v3002 = vmul.f32 %v2832, %v2984
    %v3003 = vmul.f32 %v2834, %v2986
    %v3004 = vmul.f32 %v2836, %v2988
    %v3013 = vrot.slane %v2997, 7
    %v3014 = vrot.slane %v2998, 7
    %v3015 = vrot.slane %v2999, 7
    %v3016 = vrot.slane %v3000, 7
    %v3017 = vrot.slane %v3001, 7
    %v3018 = vrot.slane %v3002, 7
    %v3019 = vrot.slane %v3003, 7
    %v3020 = vrot.slane %v3004, 7
    %v3029 = vadd.f32 %v2670, %v3013
    %v3030 = vadd.f32 %v2671, %v3014
    %v3031 = vadd.f32 %v2672, %v3015
    %v3032 = vadd.f32 %v2673, %v3016
    %v3033 = vadd.f32 %v2674, %v3017
    %v3034 = vadd.f32 %v2675, %v3018
    %v3035 = vadd.f32 %v2676, %v3019
    %v3036 = vadd.f32 %v2677, %v3020
    %v3037 = vmul.f32 %v3029, 0.125
    %v3038 = vmul.f32 %v3030, 0.125
    %v3039 = vmul.f32 %v3031, 0.125
    %v3040 = vmul.f32 %v3032, 0.125
    %v3041 = vmul.f32 %v3033, 0.125
    %v3042 = vmul.f32 %v3034, 0.125
    %v3043 = vmul.f32 %v3035, 0.125
    %v3044 = vmul.f32 %v3036, 0.125
    %v3053 = vrot.slane %v3038, 7
    %v3054 = vsel %vm517, %v3053, %v3037
    %v3055 = vrot.slane %v3039, 6
    %v3056 = vsel %vm520, %v3055, %v3054
    %v3057 = vrot.slane %v3040, 5
    %v3058 = vsel %vm523, %v3057, %v3056
    %v3059 = vrot.slane %v3041, 4
    %v3060 = vsel %vm526, %v3059, %v3058
    %v3061 = vrot.slane %v3042, 3
    %v3062 = vsel %vm529, %v3061, %v3060
    %v3063 = vrot.slane %v3043, 2
    %v3064 = vsel %vm532, %v3063, %v3062
    %v3065 = vrot.slane %v3044, 1
    %v3066 = vsel %vm535, %v3065, %v3064
    %3067 = vrot.lane.b32.xlu0 %v3066, 32
    %v3068 = vpop.permute.xlu0 %3067
    %3070 = vst.msk [vmem:[#allocation8] sm:$0xff] %vm210, %v3068
    // Predicated region
    $region30: #{lstm_mean_pallas.1} parent=1 // pred_check
      _
    $region31: #{lstm_mean_pallas.1} parent=1 // pred_check_branch
      %3072 = sbr.rel (0) target = $region33
    $region32: #{lstm_mean_pallas.1} parent=1 // pred_region
      %s3074 = ssub.s32 128, 128
      %3075 = vsyncadd [#allocation4], %s3074
      %s3077 = sshll.u32 [#allocation8], 4
      %s3078 = int_to_ptr.vmem [resolvable:$true] %s3077
      %3080 = dma.vmem_to_hbm [thread:$0]  %s3078, 128, %s4, [#allocation4]
    $region33: #{lstm_mean_pallas.1} parent=1 // pred_fallthru
      _
    // Predicated region
    $region34: #{lstm_mean_pallas.1} parent=1 // pred_check
      _
    $region35: #{lstm_mean_pallas.1} parent=1 // pred_check_branch
      %3082 = sbr.rel (0) target = $region37
    $region36: #{lstm_mean_pallas.1} parent=1 // pred_region
      %3083 = dma.done [#allocation4], 128
    $region37: #{lstm_mean_pallas.1} parent=1 // pred_fallthru
      _
    %3084 = vsyncpa [#allocation3], 1
    %3085 = vsyncpa [#allocation6], 1
    %3086 = vsyncpa [#allocation4], 1

</llo_original>
